<compile_context>
chip_gen: v7x
topology: tpu7x:2x2x1
jax: 0.10.0
libtpu: 0.0.40
codegen_flags: <defaults>
</compile_context>

<pallas_src>
import jax
import jax.numpy as jnp
from jax.experimental import pallas as pl
from jax.experimental.pallas import tpu as pltpu

# ----------------------------------------------------------------------------
# EEG channel groups (identical to the PyTorch module)
# ----------------------------------------------------------------------------
EEG_channels_name = ['Fp1', 'AF3', 'F3', 'F7', 'FC5', 'FC1', 'C3', 'T7', 'CP5',
                     'CP1', 'P3', 'P7', 'PO3', 'O1', 'Oz', 'Pz', 'Fp2', 'AF4',
                     'Fz', 'F4', 'F8', 'FC6', 'FC2', 'Cz', 'C4', 'T8', 'P6',
                     'CP2', 'P4', 'P8', 'PO4', 'O2']

g1 = ['Fp1', 'AF7', 'AF3']
g2 = ['F7', 'F5', 'F3', 'F1']
g3 = ['FC5', 'FC3', 'FC1']
g4 = ['Fp2', 'AF4', 'AF8']
g5 = ['F2', 'F4', 'F6', 'F8']
g6 = ['FC2', 'FC4', 'FC6']
g7 = ['C5', 'C3', 'C1', 'Cz', 'C2', 'C4', 'C6']
g8 = ['CP5', 'CP3', 'CP1', 'CPz', 'CP2', 'CP4', 'CP6']
g9 = ['P7', 'P5', 'P3', 'P1', 'Pz', 'P2', 'P4', 'P6', 'P8']
g10 = ['PO7', 'PO3', 'POz', 'PO4', 'PO8']
g11 = ['O1', 'Oz', 'O2']


def get_channel_index(channel_name_list, all_channels=EEG_channels_name):
    idxes = []
    for name in channel_name_list:
        if name in all_channels:
            idxes.append(all_channels.index(name))
    return idxes


G_IDX = [get_channel_index(g) for g in
         (g1, g2, g3, g4, g5, g6, g7, g8, g9, g10, g11)]

NUM_GROUPS = 11
POOL = 8


def _round_up(n, m):
    return ((n + m - 1) // m) * m


# ----------------------------------------------------------------------------
# Pallas kernel: one grid step = B_BLK samples, one fused MXU matmul
# ----------------------------------------------------------------------------
def local_gnn_kernel(x_ref, w_ref, b_ref, k_ref, o_ref):
    # x_ref : (B_BLK, C*T)   flattened input block (B_BLK samples)
    # w_ref : (1, C*T)       local_W flattened           (VMEM-resident)
    # b_ref : (1, C*T)       local_b broadcast over T    (VMEM-resident)
    # k_ref : (C*T, N_pad)   fused avg-pool x group-mean matrix, zero-padded
    # o_ref : (B_BLK, N_pad) lane-dense output slab (N_pad multiple of 128)
    z = jnp.maximum(x_ref[...] * w_ref[...] - b_ref[...], 0.0)   # VPU: ReLU(x*W-b)
    o_ref[...] = jnp.dot(z, k_ref[...],
                         preferred_element_type=jnp.float32).astype(o_ref.dtype)


# ----------------------------------------------------------------------------
# Wrapper: flatten / pad (metadata-only where possible), call kernel, unpack
# ----------------------------------------------------------------------------
def make_fused_matrix(pool_mat, group_mat):
    """K[c*T+t, g*Tp+p] = group_mat[g,c] * pool_mat[t,p], zero-padded to a
    lane-dense (multiple-of-128) column count."""
    T, Tp = pool_mat.shape
    G, C = group_mat.shape
    k = jnp.einsum('gc,tp->ctgp', group_mat, pool_mat).reshape(C * T, G * Tp)
    n_out = G * Tp
    n_pad = _round_up(max(n_out, 128), 128)
    if n_pad != n_out:
        k = jnp.pad(k, ((0, 0), (0, n_pad - n_out)))
    return k.astype(jnp.float32)


def local_gnn(x, local_W, local_b, pool_mat, group_mat, *, b_blk=128):
    B, C, T = x.shape
    Tp = pool_mat.shape[1]
    n_out = NUM_GROUPS * Tp
    CT = C * T

    k_fused = make_fused_matrix(pool_mat, group_mat)          # (C*T, N_pad)
    n_pad = k_fused.shape[1]

    # Batch tiling: B_BLK samples per grid step (sublane-aligned), pad B if needed.
    b_blk = min(b_blk, _round_up(B, 8))
    B_pad = _round_up(B, b_blk)

    x_flat = x.reshape(B, CT)                                 # metadata-only reshape
    if B_pad != B:
        x_flat = jnp.pad(x_flat, ((0, B_pad - B), (0, 0)))
    w_flat = local_W.reshape(1, CT)
    b_flat = jnp.broadcast_to(local_b, (C, T)).reshape(1, CT)

    grid = (B_pad // b_blk,)

    out_pad = pl.pallas_call(
        local_gnn_kernel,
        out_shape=jax.ShapeDtypeStruct((B_pad, n_pad), jnp.float32),
        grid_spec=pl.GridSpec(
            grid=grid,
            in_specs=[
                pl.BlockSpec((b_blk, CT), lambda i: (i, 0)),   # x: moves per step
                pl.BlockSpec((1, CT), lambda i: (0, 0)),       # W: resident
                pl.BlockSpec((1, CT), lambda i: (0, 0)),       # b: resident
                pl.BlockSpec((CT, n_pad), lambda i: (0, 0)),   # K: resident
            ],
            out_specs=pl.BlockSpec((b_blk, n_pad), lambda i: (i, 0)),
        ),
        compiler_params=pltpu.CompilerParams(
            dimension_semantics=("parallel",),        # megacore-shardable on v7x
            vmem_limit_bytes=32 * 1024 * 1024,
        ),
    )(x_flat, w_flat, b_flat, k_fused)

    # Carve the real result out of the lane-dense slab (cheap: output is tiny).
    return out_pad[:B, :n_out].reshape(B, NUM_GROUPS, Tp)


# ----------------------------------------------------------------------------
# Parameter / helper-matrix construction (plain JAX glue)
# ----------------------------------------------------------------------------
def make_params(key, C, T):
    kw, kb = jax.random.split(key)
    # xavier_normal_: std = sqrt(2 / (fan_in + fan_out))
    w_std = (2.0 / (C + T)) ** 0.5
    b_std = (2.0 / (C + 1)) ** 0.5
    local_W = jax.random.normal(kw, (C, T), jnp.float32) * w_std
    local_b = jax.random.normal(kb, (C, 1), jnp.float32) * b_std
    return local_W, local_b


def make_pool_matrix(T, pool=POOL):
    Tp = T // pool
    t = jnp.arange(T)[:, None]
    tp = jnp.arange(Tp)[None, :]
    return jnp.where(t // pool == tp, 1.0 / pool, 0.0).astype(jnp.float32)


def make_group_matrix(C):
    m = jnp.zeros((NUM_GROUPS, C), jnp.float32)
    for i, idxs in enumerate(G_IDX):
        for j in idxs:
            m = m.at[i, j].set(1.0 / len(idxs))
    return m


def local_gnn_ref(x, local_W, local_b, pool_mat, group_mat):
    """Pure-JAX reference mirroring the PyTorch forward."""
    z = jnp.maximum(x * local_W[None] - local_b[None], 0.0)     # (B, C, T)
    pooled = jnp.einsum('bct,tp->bcp', z, pool_mat)             # avg pool over T
    return jnp.einsum('gc,bcp->bgp', group_mat, pooled)         # group means


# ----------------------------------------------------------------------------
if __name__ == "__main__":
    B, C, T = 2, len(EEG_channels_name), 128   # C = 32 EEG channels
    key = jax.random.PRNGKey(0)
    kx, kp = jax.random.split(key)

    x = jax.random.normal(kx, (B, C, T), jnp.float32)
    local_W, local_b = make_params(kp, C, T)
    pool_mat = make_pool_matrix(T)
    group_mat = make_group_matrix(C)

    out = local_gnn(x, local_W, local_b, pool_mat, group_mat)
    out = jax.block_until_ready(out)

    ref = local_gnn_ref(x, local_W, local_b, pool_mat, group_mat)
    assert out.shape == (B, NUM_GROUPS, T // POOL), out.shape
    err = float(jnp.max(jnp.abs(out - ref)))
    assert err < 1e-4, err

    print("KERNEL_OK")
</pallas_src>

<mosaic_0001>
module attributes {stable_mosaic.version = 11 : i64} {
  func.func @local_gnn_kernel(%arg0: i32, %arg1: memref<8x4096xf32, #tpu.memory_space<vmem>>, %arg2: memref<1x4096xf32, #tpu.memory_space<vmem>>, %arg3: memref<1x4096xf32, #tpu.memory_space<vmem>>, %arg4: memref<4096x256xf32, #tpu.memory_space<vmem>>, %arg5: memref<8x256xf32, #tpu.memory_space<vmem>>) attributes {dimension_semantics = [#tpu.dimension_semantics<parallel>], iteration_bounds = array<i64: 1>, scalar_prefetch = 0 : i64, scratch_operands = 0 : i64, tpu.core_type = #tpu.core_type<tc>, window_params = [{transform_indices = @transform_0, window_bounds = array<i64: 8, 4096>}, {pipeline_mode = #tpu.pipeline_mode<synchronous>, transform_indices = @transform_1, window_bounds = array<i64: 1, 4096>}, {pipeline_mode = #tpu.pipeline_mode<synchronous>, transform_indices = @transform_2, window_bounds = array<i64: 1, 4096>}, {pipeline_mode = #tpu.pipeline_mode<synchronous>, transform_indices = @transform_3, window_bounds = array<i64: 4096, 256>}, {transform_indices = @transform_4, window_bounds = array<i64: 8, 256>}]} {
    %c0 = arith.constant 0 : index
    %c0_0 = arith.constant 0 : index
    %0 = vector.load %arg1[%c0, %c0_0] : memref<8x4096xf32, #tpu.memory_space<vmem>>, vector<8x4096xf32>
    %c0_1 = arith.constant 0 : index
    %c0_2 = arith.constant 0 : index
    %1 = vector.load %arg2[%c0_1, %c0_2] : memref<1x4096xf32, #tpu.memory_space<vmem>>, vector<1x4096xf32>
    %2 = vector.broadcast %1 : vector<1x4096xf32> to vector<8x4096xf32>
    %3 = arith.mulf %0, %2 : vector<8x4096xf32>
    %c0_3 = arith.constant 0 : index
    %c0_4 = arith.constant 0 : index
    %4 = vector.load %arg3[%c0_3, %c0_4] : memref<1x4096xf32, #tpu.memory_space<vmem>>, vector<1x4096xf32>
    %5 = vector.broadcast %4 : vector<1x4096xf32> to vector<8x4096xf32>
    %6 = arith.subf %3, %5 : vector<8x4096xf32>
    %cst = arith.constant 0.000000e+00 : f32
    %7 = vector.broadcast %cst : f32 to vector<8x4096xf32>
    %8 = arith.maximumf %6, %7 : vector<8x4096xf32>
    %c0_5 = arith.constant 0 : index
    %c0_6 = arith.constant 0 : index
    %9 = vector.load %arg4[%c0_5, %c0_6] : memref<4096x256xf32, #tpu.memory_space<vmem>>, vector<4096x256xf32>
    %cst_7 = arith.constant dense<0.000000e+00> : vector<8x256xf32>
    %10 = tpu.matmul %8, %9, %cst_7 {dimension_numbers = #tpu.dot_dimension_numbers<[1], [0], [0], [1], [0, 0, 1, 1], [], []>} : vector<8x4096xf32>, vector<4096x256xf32>, vector<8x256xf32> -> vector<8x256xf32>
    %c0_8 = arith.constant 0 : index
    %c0_9 = arith.constant 0 : index
    %11 = vector.load %arg5[%c0_8, %c0_9] : memref<8x256xf32, #tpu.memory_space<vmem>>, vector<8x256xf32>
    tpu.vector_store %arg5[%c0_8, %c0_9], %10 {strides = array<i32>} : memref<8x256xf32, #tpu.memory_space<vmem>>, vector<8x256xf32>,
    return
  }
  func.func @transform_0(%arg0: i32) -> (i32, i32) {
    %c0_i32 = arith.constant 0 : i32
    %c0_i32_0 = arith.constant 0 : i32
    return %arg0, %c0_i32 : i32, i32
  }
  func.func @transform_1(%arg0: i32) -> (i32, i32) {
    %c0_i32 = arith.constant 0 : i32
    %c0_i32_0 = arith.constant 0 : i32
    %c0_i32_1 = arith.constant 0 : i32
    return %c0_i32, %c0_i32_0 : i32, i32
  }
  func.func @transform_2(%arg0: i32) -> (i32, i32) {
    %c0_i32 = arith.constant 0 : i32
    %c0_i32_0 = arith.constant 0 : i32
    %c0_i32_1 = arith.constant 0 : i32
    return %c0_i32, %c0_i32_0 : i32, i32
  }
  func.func @transform_3(%arg0: i32) -> (i32, i32) {
    %c0_i32 = arith.constant 0 : i32
    %c0_i32_0 = arith.constant 0 : i32
    %c0_i32_1 = arith.constant 0 : i32
    return %c0_i32, %c0_i32_0 : i32, i32
  }
  func.func @transform_4(%arg0: i32) -> (i32, i32) {
    %c0_i32 = arith.constant 0 : i32
    %c0_i32_0 = arith.constant 0 : i32
    return %arg0, %c0_i32 : i32, i32
  }
}

</mosaic_0001>

<llo_original>
// kernel: tpu_custom_call.1
$region0: #{tpu_custom_call.1}
  #allocation0 [shape = 'u32[]', space=smem, size = 0x4, offset = 0x4, fixed_abs, tag = 'smem constant byte address 0x4 - core index']
  #allocation1 [shape = 'u32[144,128]{1,0:T(1,128)}', space=vmem, size = 0x12000, scoped, tag = 'internal scratch']
  %s0 = inlined_call_operand.hbm [shape: f32[8,4096], index: 0, kind: input, shape index: {}]
  %s1 = inlined_call_operand.hbm [shape: f32[1,4096], index: 1, kind: input, shape index: {}]
  %s2 = inlined_call_operand.hbm [shape: f32[1,4096], index: 2, kind: input, shape index: {}]
  %s3 = inlined_call_operand.hbm [shape: f32[4096,256], index: 3, kind: input, shape index: {}]
  %s4 = inlined_call_operand.hbm [shape: f32[8,256], index: 4, kind: output, shape index: {}]
  %s5 = sld [smem:[#allocation0]]
  $region42: #{tpu_custom_call.1} parent=0
    _
  %s7 = ssub.s32 1, %s5
  %s8 = scalar_select 0, %s7, %s5
  $region1: #{tpu_custom_call.1} parent=0
    #allocation2 [shape = 'u8[131072]{0}', space=vmem, size = 0x20000, scoped, tag = 'input window, operand 0, single buffered']
    #allocation3 [shape = 's32[1]{0}', space=sflag, size = 0x4, scoped, tag = 'scoped memory for tpu_custom_call.1']
    #allocation4 [shape = 's32[1]{0}', space=sflag, size = 0x4, scoped, tag = 'scoped memory for tpu_custom_call.1']
    #allocation5 [shape = 'u8[16384]{0}', space=vmem, size = 0x4000, scoped, tag = 'input window, operand 1, single buffered']
    #allocation6 [shape = 's32[1]{0}', space=sflag, size = 0x4, scoped, tag = 'scoped memory for tpu_custom_call.1']
    #allocation7 [shape = 'u8[16384]{0}', space=vmem, size = 0x4000, scoped, tag = 'input window, operand 2, single buffered']
    #allocation8 [shape = 'u8[4194304]{0}', space=vmem, size = 0x400000, scoped, tag = 'input window, operand 3, single buffered']
    #allocation9 [shape = 's32[1]{0}', space=sflag, size = 0x4, scoped, tag = 'scoped memory for tpu_custom_call.1']
    #allocation10 [shape = 'u8[8192]{0}', space=vmem, size = 0x2000, scoped, tag = 'output window, operand 0, single buffered']
    %9 = vsyncpa [#allocation3], 0
    %10 = vsyncpa [#allocation6], 0
    %11 = vsyncpa [#allocation9], 0
    %12 = vsyncpa [#allocation4], 0
    // Predicated region
    $region2: #{tpu_custom_call.1} parent=1 // pred_check
      _
    $region3: #{tpu_custom_call.1} parent=1 // pred_check_branch
      %14 = sbr.rel (0) target = $region5
    $region4: #{tpu_custom_call.1} parent=1 // pred_region
      %s16 = ssub.s32 4096, 4096
      %17 = vsyncadd [#allocation3], %s16
      %s19 = sshll.u32 [#allocation2], 4
      %s20 = int_to_ptr.vmem [resolvable:$true] %s19
      %22 = dma.hbm_to_vmem [thread:$0]  %s0, 4096, %s20, [#allocation3]
    $region5: #{tpu_custom_call.1} parent=1 // pred_fallthru
      _
    // Predicated region
    $region6: #{tpu_custom_call.1} parent=1 // pred_check
      _
    $region7: #{tpu_custom_call.1} parent=1 // pred_check_branch
      %24 = sbr.rel (0) target = $region9
    $region8: #{tpu_custom_call.1} parent=1 // pred_region
      %s26 = ssub.s32 512, 512
      %27 = vsyncadd [#allocation6], %s26
      %s29 = sshll.u32 [#allocation5], 4
      %s30 = int_to_ptr.vmem [resolvable:$true] %s29
      %32 = dma.hbm_to_vmem [thread:$0]  %s1, 512, %s30, [#allocation6]
    $region9: #{tpu_custom_call.1} parent=1 // pred_fallthru
      _
    // Predicated region
    $region10: #{tpu_custom_call.1} parent=1 // pred_check
      _
    $region11: #{tpu_custom_call.1} parent=1 // pred_check_branch
      %34 = sbr.rel (0) target = $region13
    $region12: #{tpu_custom_call.1} parent=1 // pred_region
      %s36 = ssub.s32 512, 512
      %37 = vsyncadd [#allocation6], %s36
      %s39 = sshll.u32 [#allocation7], 4
      %s40 = int_to_ptr.vmem [resolvable:$true] %s39
      %42 = dma.hbm_to_vmem [thread:$0]  %s2, 512, %s40, [#allocation6]
    $region13: #{tpu_custom_call.1} parent=1 // pred_fallthru
      _
    // Predicated region
    $region14: #{tpu_custom_call.1} parent=1 // pred_check
      _
    $region15: #{tpu_custom_call.1} parent=1 // pred_check_branch
      %44 = sbr.rel (0) target = $region17
    $region16: #{tpu_custom_call.1} parent=1 // pred_region
      %s46 = ssub.s32 131072, 131072
      %47 = vsyncadd [#allocation9], %s46
      %s48 = sshll.u32 [#allocation8], 4
      %s49 = int_to_ptr.vmem [resolvable:$true] %s48
      %54 = dma.hbm_to_vmem [thread:$0]  %s3, 131072, %s49, [#allocation9], 256, 256, 16
    $region17: #{tpu_custom_call.1} parent=1 // pred_fallthru
      _
    // Predicated region
    $region18: #{tpu_custom_call.1} parent=1 // pred_check
      _
    $region19: #{tpu_custom_call.1} parent=1 // pred_check_branch
      %56 = sbr.rel (0) target = $region21
    $region20: #{tpu_custom_call.1} parent=1 // pred_region
      %57 = dma.done [#allocation3], 4096
    $region21: #{tpu_custom_call.1} parent=1 // pred_fallthru
      _
    // Predicated region
    $region22: #{tpu_custom_call.1} parent=1 // pred_check
      _
    $region23: #{tpu_custom_call.1} parent=1 // pred_check_branch
      %59 = sbr.rel (0) target = $region25
    $region24: #{tpu_custom_call.1} parent=1 // pred_region
      %60 = dma.done [#allocation6], 512
    $region25: #{tpu_custom_call.1} parent=1 // pred_fallthru
      _
    // Predicated region
    $region26: #{tpu_custom_call.1} parent=1 // pred_check
      _
    $region27: #{tpu_custom_call.1} parent=1 // pred_check_branch
      %62 = sbr.rel (0) target = $region29
    $region28: #{tpu_custom_call.1} parent=1 // pred_region
      %63 = dma.done [#allocation6], 512
    $region29: #{tpu_custom_call.1} parent=1 // pred_fallthru
      _
    // Predicated region
    $region30: #{tpu_custom_call.1} parent=1 // pred_check
      _
    $region31: #{tpu_custom_call.1} parent=1 // pred_check_branch
      %65 = sbr.rel (0) target = $region33
    $region32: #{tpu_custom_call.1} parent=1 // pred_region
      %66 = dma.done [#allocation9], 131072
    $region33: #{tpu_custom_call.1} parent=1 // pred_fallthru
      _
    %v67 = vld [vmem:[#allocation2] sm:$0xff]
    %v68 = vld [vmem:[#allocation2 + $0x8] sm:$0xff]
    %v69 = vld [vmem:[#allocation2 + $0x10] sm:$0xff]
    %v70 = vld [vmem:[#allocation2 + $0x18] sm:$0xff]
    %v71 = vld [vmem:[#allocation2 + $0x20] sm:$0xff]
    %v72 = vld [vmem:[#allocation2 + $0x28] sm:$0xff]
    %v73 = vld [vmem:[#allocation2 + $0x30] sm:$0xff]
    %v74 = vld [vmem:[#allocation2 + $0x38] sm:$0xff]
    %v75 = vld [vmem:[#allocation2 + $0x40] sm:$0xff]
    %v76 = vld [vmem:[#allocation2 + $0x48] sm:$0xff]
    %v77 = vld [vmem:[#allocation2 + $0x50] sm:$0xff]
    %v78 = vld [vmem:[#allocation2 + $0x58] sm:$0xff]
    %v79 = vld [vmem:[#allocation2 + $0x60] sm:$0xff]
    %v80 = vld [vmem:[#allocation2 + $0x68] sm:$0xff]
    %v81 = vld [vmem:[#allocation2 + $0x70] sm:$0xff]
    %v82 = vld [vmem:[#allocation2 + $0x78] sm:$0xff]
    %v83 = vld [vmem:[#allocation2 + $0x80] sm:$0xff]
    %v84 = vld [vmem:[#allocation2 + $0x88] sm:$0xff]
    %v85 = vld [vmem:[#allocation2 + $0x90] sm:$0xff]
    %v86 = vld [vmem:[#allocation2 + $0x98] sm:$0xff]
    %v87 = vld [vmem:[#allocation2 + $0xa0] sm:$0xff]
    %v88 = vld [vmem:[#allocation2 + $0xa8] sm:$0xff]
    %v89 = vld [vmem:[#allocation2 + $0xb0] sm:$0xff]
    %v90 = vld [vmem:[#allocation2 + $0xb8] sm:$0xff]
    %v91 = vld [vmem:[#allocation2 + $0xc0] sm:$0xff]
    %v92 = vld [vmem:[#allocation2 + $0xc8] sm:$0xff]
    %v93 = vld [vmem:[#allocation2 + $0xd0] sm:$0xff]
    %v94 = vld [vmem:[#allocation2 + $0xd8] sm:$0xff]
    %v95 = vld [vmem:[#allocation2 + $0xe0] sm:$0xff]
    %v96 = vld [vmem:[#allocation2 + $0xe8] sm:$0xff]
    %v97 = vld [vmem:[#allocation2 + $0xf0] sm:$0xff]
    %v98 = vld [vmem:[#allocation2 + $0xf8] sm:$0xff]
    %v99 = vld [vmem:[#allocation5] sm:$0xff]
    %v100 = vld [vmem:[#allocation5 + $0x8] sm:$0xff]
    %v101 = vld [vmem:[#allocation5 + $0x10] sm:$0xff]
    %v102 = vld [vmem:[#allocation5 + $0x18] sm:$0xff]
    %v107 = vlaneseq
    %v108 = vshrl.u32 %v107, 7
    %v109 = vsub.s32 0, %v108
    %v110 = vrot.slane %v99, %v109
    %v111 = vlaneseq
    %v112 = vshrl.u32 %v111, 7
    %v113 = vsub.s32 1, %v112
    %v114 = vrot.slane %v99, %v113
    %v115 = vlaneseq
    %v116 = vshrl.u32 %v115, 7
    %v117 = vsub.s32 2, %v116
    %v118 = vrot.slane %v99, %v117
    %v119 = vlaneseq
    %v120 = vshrl.u32 %v119, 7
    %v121 = vsub.s32 3, %v120
    %v122 = vrot.slane %v99, %v121
    %v123 = vlaneseq
    %v124 = vshrl.u32 %v123, 7
    %v125 = vsub.s32 4, %v124
    %v126 = vrot.slane %v99, %v125
    %v127 = vlaneseq
    %v128 = vshrl.u32 %v127, 7
    %v129 = vsub.s32 5, %v128
    %v130 = vrot.slane %v99, %v129
    %v131 = vlaneseq
    %v132 = vshrl.u32 %v131, 7
    %v133 = vsub.s32 6, %v132
    %v134 = vrot.slane %v99, %v133
    %v135 = vlaneseq
    %v136 = vshrl.u32 %v135, 7
    %v137 = vsub.s32 7, %v136
    %v138 = vrot.slane %v99, %v137
    %v139 = vlaneseq
    %v140 = vshrl.u32 %v139, 7
    %v141 = vsub.s32 0, %v140
    %v142 = vrot.slane %v100, %v141
    %v143 = vlaneseq
    %v144 = vshrl.u32 %v143, 7
    %v145 = vsub.s32 1, %v144
    %v146 = vrot.slane %v100, %v145
    %v147 = vlaneseq
    %v148 = vshrl.u32 %v147, 7
    %v149 = vsub.s32 2, %v148
    %v150 = vrot.slane %v100, %v149
    %v151 = vlaneseq
    %v152 = vshrl.u32 %v151, 7
    %v153 = vsub.s32 3, %v152
    %v154 = vrot.slane %v100, %v153
    %v155 = vlaneseq
    %v156 = vshrl.u32 %v155, 7
    %v157 = vsub.s32 4, %v156
    %v158 = vrot.slane %v100, %v157
    %v159 = vlaneseq
    %v160 = vshrl.u32 %v159, 7
    %v161 = vsub.s32 5, %v160
    %v162 = vrot.slane %v100, %v161
    %v163 = vlaneseq
    %v164 = vshrl.u32 %v163, 7
    %v165 = vsub.s32 6, %v164
    %v166 = vrot.slane %v100, %v165
    %v167 = vlaneseq
    %v168 = vshrl.u32 %v167, 7
    %v169 = vsub.s32 7, %v168
    %v170 = vrot.slane %v100, %v169
    %v171 = vlaneseq
    %v172 = vshrl.u32 %v171, 7
    %v173 = vsub.s32 0, %v172
    %v174 = vrot.slane %v101, %v173
    %v175 = vlaneseq
    %v176 = vshrl.u32 %v175, 7
    %v177 = vsub.s32 1, %v176
    %v178 = vrot.slane %v101, %v177
    %v179 = vlaneseq
    %v180 = vshrl.u32 %v179, 7
    %v181 = vsub.s32 2, %v180
    %v182 = vrot.slane %v101, %v181
    %v183 = vlaneseq
    %v184 = vshrl.u32 %v183, 7
    %v185 = vsub.s32 3, %v184
    %v186 = vrot.slane %v101, %v185
    %v187 = vlaneseq
    %v188 = vshrl.u32 %v187, 7
    %v189 = vsub.s32 4, %v188
    %v190 = vrot.slane %v101, %v189
    %v191 = vlaneseq
    %v192 = vshrl.u32 %v191, 7
    %v193 = vsub.s32 5, %v192
    %v194 = vrot.slane %v101, %v193
    %v195 = vlaneseq
    %v196 = vshrl.u32 %v195, 7
    %v197 = vsub.s32 6, %v196
    %v198 = vrot.slane %v101, %v197
    %v199 = vlaneseq
    %v200 = vshrl.u32 %v199, 7
    %v201 = vsub.s32 7, %v200
    %v202 = vrot.slane %v101, %v201
    %v203 = vlaneseq
    %v204 = vshrl.u32 %v203, 7
    %v205 = vsub.s32 0, %v204
    %v206 = vrot.slane %v102, %v205
    %v207 = vlaneseq
    %v208 = vshrl.u32 %v207, 7
    %v209 = vsub.s32 1, %v208
    %v210 = vrot.slane %v102, %v209
    %v211 = vlaneseq
    %v212 = vshrl.u32 %v211, 7
    %v213 = vsub.s32 2, %v212
    %v214 = vrot.slane %v102, %v213
    %v215 = vlaneseq
    %v216 = vshrl.u32 %v215, 7
    %v217 = vsub.s32 3, %v216
    %v218 = vrot.slane %v102, %v217
    %v219 = vlaneseq
    %v220 = vshrl.u32 %v219, 7
    %v221 = vsub.s32 4, %v220
    %v222 = vrot.slane %v102, %v221
    %v223 = vlaneseq
    %v224 = vshrl.u32 %v223, 7
    %v225 = vsub.s32 5, %v224
    %v226 = vrot.slane %v102, %v225
    %v227 = vlaneseq
    %v228 = vshrl.u32 %v227, 7
    %v229 = vsub.s32 6, %v228
    %v230 = vrot.slane %v102, %v229
    %v231 = vlaneseq
    %v232 = vshrl.u32 %v231, 7
    %v233 = vsub.s32 7, %v232
    %v234 = vrot.slane %v102, %v233
    %v267 = vmul.f32 %v67, %v110
    %v268 = vmul.f32 %v68, %v114
    %v269 = vmul.f32 %v69, %v118
    %v270 = vmul.f32 %v70, %v122
    %v271 = vmul.f32 %v71, %v126
    %v272 = vmul.f32 %v72, %v130
    %v273 = vmul.f32 %v73, %v134
    %v274 = vmul.f32 %v74, %v138
    %v275 = vmul.f32 %v75, %v142
    %v276 = vmul.f32 %v76, %v146
    %v277 = vmul.f32 %v77, %v150
    %v278 = vmul.f32 %v78, %v154
    %v279 = vmul.f32 %v79, %v158
    %v280 = vmul.f32 %v80, %v162
    %v281 = vmul.f32 %v81, %v166
    %v282 = vmul.f32 %v82, %v170
    %v283 = vmul.f32 %v83, %v174
    %v284 = vmul.f32 %v84, %v178
    %v285 = vmul.f32 %v85, %v182
    %v286 = vmul.f32 %v86, %v186
    %v287 = vmul.f32 %v87, %v190
    %v288 = vmul.f32 %v88, %v194
    %v289 = vmul.f32 %v89, %v198
    %v290 = vmul.f32 %v90, %v202
    %v291 = vmul.f32 %v91, %v206
    %v292 = vmul.f32 %v92, %v210
    %v293 = vmul.f32 %v93, %v214
    %v294 = vmul.f32 %v94, %v218
    %v295 = vmul.f32 %v95, %v222
    %v296 = vmul.f32 %v96, %v226
    %v297 = vmul.f32 %v97, %v230
    %v298 = vmul.f32 %v98, %v234
    %v299 = vld [vmem:[#allocation7] sm:$0xff]
    %v300 = vld [vmem:[#allocation7 + $0x8] sm:$0xff]
    %v301 = vld [vmem:[#allocation7 + $0x10] sm:$0xff]
    %v302 = vld [vmem:[#allocation7 + $0x18] sm:$0xff]
    %v307 = vlaneseq
    %v308 = vshrl.u32 %v307, 7
    %v309 = vsub.s32 0, %v308
    %v310 = vrot.slane %v299, %v309
    %v311 = vlaneseq
    %v312 = vshrl.u32 %v311, 7
    %v313 = vsub.s32 1, %v312
    %v314 = vrot.slane %v299, %v313
    %v315 = vlaneseq
    %v316 = vshrl.u32 %v315, 7
    %v317 = vsub.s32 2, %v316
    %v318 = vrot.slane %v299, %v317
    %v319 = vlaneseq
    %v320 = vshrl.u32 %v319, 7
    %v321 = vsub.s32 3, %v320
    %v322 = vrot.slane %v299, %v321
    %v323 = vlaneseq
    %v324 = vshrl.u32 %v323, 7
    %v325 = vsub.s32 4, %v324
    %v326 = vrot.slane %v299, %v325
    %v327 = vlaneseq
    %v328 = vshrl.u32 %v327, 7
    %v329 = vsub.s32 5, %v328
    %v330 = vrot.slane %v299, %v329
    %v331 = vlaneseq
    %v332 = vshrl.u32 %v331, 7
    %v333 = vsub.s32 6, %v332
    %v334 = vrot.slane %v299, %v333
    %v335 = vlaneseq
    %v336 = vshrl.u32 %v335, 7
    %v337 = vsub.s32 7, %v336
    %v338 = vrot.slane %v299, %v337
    %v339 = vlaneseq
    %v340 = vshrl.u32 %v339, 7
    %v341 = vsub.s32 0, %v340
    %v342 = vrot.slane %v300, %v341
    %v343 = vlaneseq
    %v344 = vshrl.u32 %v343, 7
    %v345 = vsub.s32 1, %v344
    %v346 = vrot.slane %v300, %v345
    %v347 = vlaneseq
    %v348 = vshrl.u32 %v347, 7
    %v349 = vsub.s32 2, %v348
    %v350 = vrot.slane %v300, %v349
    %v351 = vlaneseq
    %v352 = vshrl.u32 %v351, 7
    %v353 = vsub.s32 3, %v352
    %v354 = vrot.slane %v300, %v353
    %v355 = vlaneseq
    %v356 = vshrl.u32 %v355, 7
    %v357 = vsub.s32 4, %v356
    %v358 = vrot.slane %v300, %v357
    %v359 = vlaneseq
    %v360 = vshrl.u32 %v359, 7
    %v361 = vsub.s32 5, %v360
    %v362 = vrot.slane %v300, %v361
    %v363 = vlaneseq
    %v364 = vshrl.u32 %v363, 7
    %v365 = vsub.s32 6, %v364
    %v366 = vrot.slane %v300, %v365
    %v367 = vlaneseq
    %v368 = vshrl.u32 %v367, 7
    %v369 = vsub.s32 7, %v368
    %v370 = vrot.slane %v300, %v369
    %v371 = vlaneseq
    %v372 = vshrl.u32 %v371, 7
    %v373 = vsub.s32 0, %v372
    %v374 = vrot.slane %v301, %v373
    %v375 = vlaneseq
    %v376 = vshrl.u32 %v375, 7
    %v377 = vsub.s32 1, %v376
    %v378 = vrot.slane %v301, %v377
    %v379 = vlaneseq
    %v380 = vshrl.u32 %v379, 7
    %v381 = vsub.s32 2, %v380
    %v382 = vrot.slane %v301, %v381
    %v383 = vlaneseq
    %v384 = vshrl.u32 %v383, 7
    %v385 = vsub.s32 3, %v384
    %v386 = vrot.slane %v301, %v385
    %v387 = vlaneseq
    %v388 = vshrl.u32 %v387, 7
    %v389 = vsub.s32 4, %v388
    %v390 = vrot.slane %v301, %v389
    %v391 = vlaneseq
    %v392 = vshrl.u32 %v391, 7
    %v393 = vsub.s32 5, %v392
    %v394 = vrot.slane %v301, %v393
    %v395 = vlaneseq
    %v396 = vshrl.u32 %v395, 7
    %v397 = vsub.s32 6, %v396
    %v398 = vrot.slane %v301, %v397
    %v399 = vlaneseq
    %v400 = vshrl.u32 %v399, 7
    %v401 = vsub.s32 7, %v400
    %v402 = vrot.slane %v301, %v401
    %v403 = vlaneseq
    %v404 = vshrl.u32 %v403, 7
    %v405 = vsub.s32 0, %v404
    %v406 = vrot.slane %v302, %v405
    %v407 = vlaneseq
    %v408 = vshrl.u32 %v407, 7
    %v409 = vsub.s32 1, %v408
    %v410 = vrot.slane %v302, %v409
    %v411 = vlaneseq
    %v412 = vshrl.u32 %v411, 7
    %v413 = vsub.s32 2, %v412
    %v414 = vrot.slane %v302, %v413
    %v415 = vlaneseq
    %v416 = vshrl.u32 %v415, 7
    %v417 = vsub.s32 3, %v416
    %v418 = vrot.slane %v302, %v417
    %v419 = vlaneseq
    %v420 = vshrl.u32 %v419, 7
    %v421 = vsub.s32 4, %v420
    %v422 = vrot.slane %v302, %v421
    %v423 = vlaneseq
    %v424 = vshrl.u32 %v423, 7
    %v425 = vsub.s32 5, %v424
    %v426 = vrot.slane %v302, %v425
    %v427 = vlaneseq
    %v428 = vshrl.u32 %v427, 7
    %v429 = vsub.s32 6, %v428
    %v430 = vrot.slane %v302, %v429
    %v431 = vlaneseq
    %v432 = vshrl.u32 %v431, 7
    %v433 = vsub.s32 7, %v432
    %v434 = vrot.slane %v302, %v433
    %v467 = vsub.f32 %v267, %v310
    %v468 = vsub.f32 %v268, %v314
    %v469 = vsub.f32 %v269, %v318
    %v470 = vsub.f32 %v270, %v322
    %v471 = vsub.f32 %v271, %v326
    %v472 = vsub.f32 %v272, %v330
    %v473 = vsub.f32 %v273, %v334
    %v474 = vsub.f32 %v274, %v338
    %v475 = vsub.f32 %v275, %v342
    %v476 = vsub.f32 %v276, %v346
    %v477 = vsub.f32 %v277, %v350
    %v478 = vsub.f32 %v278, %v354
    %v479 = vsub.f32 %v279, %v358
    %v480 = vsub.f32 %v280, %v362
    %v481 = vsub.f32 %v281, %v366
    %v482 = vsub.f32 %v282, %v370
    %v483 = vsub.f32 %v283, %v374
    %v484 = vsub.f32 %v284, %v378
    %v485 = vsub.f32 %v285, %v382
    %v486 = vsub.f32 %v286, %v386
    %v487 = vsub.f32 %v287, %v390
    %v488 = vsub.f32 %v288, %v394
    %v489 = vsub.f32 %v289, %v398
    %v490 = vsub.f32 %v290, %v402
    %v491 = vsub.f32 %v291, %v406
    %v492 = vsub.f32 %v292, %v410
    %v493 = vsub.f32 %v293, %v414
    %v494 = vsub.f32 %v294, %v418
    %v495 = vsub.f32 %v295, %v422
    %v496 = vsub.f32 %v296, %v426
    %v497 = vsub.f32 %v297, %v430
    %v498 = vsub.f32 %v298, %v434
    %v499 = vmax.f32 %v467, 0.0
    %v500 = vmax.f32 %v468, 0.0
    %v501 = vmax.f32 %v469, 0.0
    %v502 = vmax.f32 %v470, 0.0
    %v503 = vmax.f32 %v471, 0.0
    %v504 = vmax.f32 %v472, 0.0
    %v505 = vmax.f32 %v473, 0.0
    %v506 = vmax.f32 %v474, 0.0
    %v507 = vmax.f32 %v475, 0.0
    %v508 = vmax.f32 %v476, 0.0
    %v509 = vmax.f32 %v477, 0.0
    %v510 = vmax.f32 %v478, 0.0
    %v511 = vmax.f32 %v479, 0.0
    %v512 = vmax.f32 %v480, 0.0
    %v513 = vmax.f32 %v481, 0.0
    %v514 = vmax.f32 %v482, 0.0
    %v515 = vmax.f32 %v483, 0.0
    %v516 = vmax.f32 %v484, 0.0
    %v517 = vmax.f32 %v485, 0.0
    %v518 = vmax.f32 %v486, 0.0
    %v519 = vmax.f32 %v487, 0.0
    %v520 = vmax.f32 %v488, 0.0
    %v521 = vmax.f32 %v489, 0.0
    %v522 = vmax.f32 %v490, 0.0
    %v523 = vmax.f32 %v491, 0.0
    %v524 = vmax.f32 %v492, 0.0
    %v525 = vmax.f32 %v493, 0.0
    %v526 = vmax.f32 %v494, 0.0
    %v527 = vmax.f32 %v495, 0.0
    %v528 = vmax.f32 %v496, 0.0
    %v529 = vmax.f32 %v497, 0.0
    %v530 = vmax.f32 %v498, 0.0
    %v531 = vld [vmem:[#allocation8] sm:$0xff]
    %v532 = vld [vmem:[#allocation8 + $0x8] sm:$0xff]
    %v533 = vld [vmem:[#allocation8 + $0x10] sm:$0xff]
    %v534 = vld [vmem:[#allocation8 + $0x18] sm:$0xff]
    %v535 = vld [vmem:[#allocation8 + $0x20] sm:$0xff]
    %v536 = vld [vmem:[#allocation8 + $0x28] sm:$0xff]
    %v537 = vld [vmem:[#allocation8 + $0x30] sm:$0xff]
    %v538 = vld [vmem:[#allocation8 + $0x38] sm:$0xff]
    %v539 = vld [vmem:[#allocation8 + $0x40] sm:$0xff]
    %v540 = vld [vmem:[#allocation8 + $0x48] sm:$0xff]
    %v541 = vld [vmem:[#allocation8 + $0x50] sm:$0xff]
    %v542 = vld [vmem:[#allocation8 + $0x58] sm:$0xff]
    %v543 = vld [vmem:[#allocation8 + $0x60] sm:$0xff]
    %v544 = vld [vmem:[#allocation8 + $0x68] sm:$0xff]
    %v545 = vld [vmem:[#allocation8 + $0x70] sm:$0xff]
    %v546 = vld [vmem:[#allocation8 + $0x78] sm:$0xff]
    %v547 = vld [vmem:[#allocation8 + $0x80] sm:$0xff]
    %v548 = vld [vmem:[#allocation8 + $0x88] sm:$0xff]
    %v549 = vld [vmem:[#allocation8 + $0x90] sm:$0xff]
    %v550 = vld [vmem:[#allocation8 + $0x98] sm:$0xff]
    %v551 = vld [vmem:[#allocation8 + $0xa0] sm:$0xff]
    %v552 = vld [vmem:[#allocation8 + $0xa8] sm:$0xff]
    %v553 = vld [vmem:[#allocation8 + $0xb0] sm:$0xff]
    %v554 = vld [vmem:[#allocation8 + $0xb8] sm:$0xff]
    %v555 = vld [vmem:[#allocation8 + $0xc0] sm:$0xff]
    %v556 = vld [vmem:[#allocation8 + $0xc8] sm:$0xff]
    %v557 = vld [vmem:[#allocation8 + $0xd0] sm:$0xff]
    %v558 = vld [vmem:[#allocation8 + $0xd8] sm:$0xff]
    %v559 = vld [vmem:[#allocation8 + $0xe0] sm:$0xff]
    %v560 = vld [vmem:[#allocation8 + $0xe8] sm:$0xff]
    %v561 = vld [vmem:[#allocation8 + $0xf0] sm:$0xff]
    %v562 = vld [vmem:[#allocation8 + $0xf8] sm:$0xff]
    %v563 = vld [vmem:[#allocation8 + $0x100] sm:$0xff]
    %v564 = vld [vmem:[#allocation8 + $0x108] sm:$0xff]
    %v565 = vld [vmem:[#allocation8 + $0x110] sm:$0xff]
    %v566 = vld [vmem:[#allocation8 + $0x118] sm:$0xff]
    %v567 = vld [vmem:[#allocation8 + $0x120] sm:$0xff]
    %v568 = vld [vmem:[#allocation8 + $0x128] sm:$0xff]
    %v569 = vld [vmem:[#allocation8 + $0x130] sm:$0xff]
    %v570 = vld [vmem:[#allocation8 + $0x138] sm:$0xff]
    %v571 = vld [vmem:[#allocation8 + $0x140] sm:$0xff]
    %v572 = vld [vmem:[#allocation8 + $0x148] sm:$0xff]
    %v573 = vld [vmem:[#allocation8 + $0x150] sm:$0xff]
    %v574 = vld [vmem:[#allocation8 + $0x158] sm:$0xff]
    %v575 = vld [vmem:[#allocation8 + $0x160] sm:$0xff]
    %v576 = vld [vmem:[#allocation8 + $0x168] sm:$0xff]
    %v577 = vld [vmem:[#allocation8 + $0x170] sm:$0xff]
    %v578 = vld [vmem:[#allocation8 + $0x178] sm:$0xff]
    %v579 = vld [vmem:[#allocation8 + $0x180] sm:$0xff]
    %v580 = vld [vmem:[#allocation8 + $0x188] sm:$0xff]
    %v581 = vld [vmem:[#allocation8 + $0x190] sm:$0xff]
    %v582 = vld [vmem:[#allocation8 + $0x198] sm:$0xff]
    %v583 = vld [vmem:[#allocation8 + $0x1a0] sm:$0xff]
    %v584 = vld [vmem:[#allocation8 + $0x1a8] sm:$0xff]
    %v585 = vld [vmem:[#allocation8 + $0x1b0] sm:$0xff]
    %v586 = vld [vmem:[#allocation8 + $0x1b8] sm:$0xff]
    %v587 = vld [vmem:[#allocation8 + $0x1c0] sm:$0xff]
    %v588 = vld [vmem:[#allocation8 + $0x1c8] sm:$0xff]
    %v589 = vld [vmem:[#allocation8 + $0x1d0] sm:$0xff]
    %v590 = vld [vmem:[#allocation8 + $0x1d8] sm:$0xff]
    %v591 = vld [vmem:[#allocation8 + $0x1e0] sm:$0xff]
    %v592 = vld [vmem:[#allocation8 + $0x1e8] sm:$0xff]
    %v593 = vld [vmem:[#allocation8 + $0x1f0] sm:$0xff]
    %v594 = vld [vmem:[#allocation8 + $0x1f8] sm:$0xff]
    %v595 = vld [vmem:[#allocation8 + $0x200] sm:$0xff]
    %v596 = vld [vmem:[#allocation8 + $0x208] sm:$0xff]
    %v597 = vld [vmem:[#allocation8 + $0x210] sm:$0xff]
    %v598 = vld [vmem:[#allocation8 + $0x218] sm:$0xff]
    %v599 = vld [vmem:[#allocation8 + $0x220] sm:$0xff]
    %v600 = vld [vmem:[#allocation8 + $0x228] sm:$0xff]
    %v601 = vld [vmem:[#allocation8 + $0x230] sm:$0xff]
    %v602 = vld [vmem:[#allocation8 + $0x238] sm:$0xff]
    %v603 = vld [vmem:[#allocation8 + $0x240] sm:$0xff]
    %v604 = vld [vmem:[#allocation8 + $0x248] sm:$0xff]
    %v605 = vld [vmem:[#allocation8 + $0x250] sm:$0xff]
    %v606 = vld [vmem:[#allocation8 + $0x258] sm:$0xff]
    %v607 = vld [vmem:[#allocation8 + $0x260] sm:$0xff]
    %v608 = vld [vmem:[#allocation8 + $0x268] sm:$0xff]
    %v609 = vld [vmem:[#allocation8 + $0x270] sm:$0xff]
    %v610 = vld [vmem:[#allocation8 + $0x278] sm:$0xff]
    %v611 = vld [vmem:[#allocation8 + $0x280] sm:$0xff]
    %v612 = vld [vmem:[#allocation8 + $0x288] sm:$0xff]
    %v613 = vld [vmem:[#allocation8 + $0x290] sm:$0xff]
    %v614 = vld [vmem:[#allocation8 + $0x298] sm:$0xff]
    %v615 = vld [vmem:[#allocation8 + $0x2a0] sm:$0xff]
    %v616 = vld [vmem:[#allocation8 + $0x2a8] sm:$0xff]
    %v617 = vld [vmem:[#allocation8 + $0x2b0] sm:$0xff]
    %v618 = vld [vmem:[#allocation8 + $0x2b8] sm:$0xff]
    %v619 = vld [vmem:[#allocation8 + $0x2c0] sm:$0xff]
    %v620 = vld [vmem:[#allocation8 + $0x2c8] sm:$0xff]
    %v621 = vld [vmem:[#allocation8 + $0x2d0] sm:$0xff]
    %v622 = vld [vmem:[#allocation8 + $0x2d8] sm:$0xff]
    %v623 = vld [vmem:[#allocation8 + $0x2e0] sm:$0xff]
    %v624 = vld [vmem:[#allocation8 + $0x2e8] sm:$0xff]
    %v625 = vld [vmem:[#allocation8 + $0x2f0] sm:$0xff]
    %v626 = vld [vmem:[#allocation8 + $0x2f8] sm:$0xff]
    %v627 = vld [vmem:[#allocation8 + $0x300] sm:$0xff]
    %v628 = vld [vmem:[#allocation8 + $0x308] sm:$0xff]
    %v629 = vld [vmem:[#allocation8 + $0x310] sm:$0xff]
    %v630 = vld [vmem:[#allocation8 + $0x318] sm:$0xff]
    %v631 = vld [vmem:[#allocation8 + $0x320] sm:$0xff]
    %v632 = vld [vmem:[#allocation8 + $0x328] sm:$0xff]
    %v633 = vld [vmem:[#allocation8 + $0x330] sm:$0xff]
    %v634 = vld [vmem:[#allocation8 + $0x338] sm:$0xff]
    %v635 = vld [vmem:[#allocation8 + $0x340] sm:$0xff]
    %v636 = vld [vmem:[#allocation8 + $0x348] sm:$0xff]
    %v637 = vld [vmem:[#allocation8 + $0x350] sm:$0xff]
    %v638 = vld [vmem:[#allocation8 + $0x358] sm:$0xff]
    %v639 = vld [vmem:[#allocation8 + $0x360] sm:$0xff]
    %v640 = vld [vmem:[#allocation8 + $0x368] sm:$0xff]
    %v641 = vld [vmem:[#allocation8 + $0x370] sm:$0xff]
    %v642 = vld [vmem:[#allocation8 + $0x378] sm:$0xff]
    %v643 = vld [vmem:[#allocation8 + $0x380] sm:$0xff]
    %v644 = vld [vmem:[#allocation8 + $0x388] sm:$0xff]
    %v645 = vld [vmem:[#allocation8 + $0x390] sm:$0xff]
    %v646 = vld [vmem:[#allocation8 + $0x398] sm:$0xff]
    %v647 = vld [vmem:[#allocation8 + $0x3a0] sm:$0xff]
    %v648 = vld [vmem:[#allocation8 + $0x3a8] sm:$0xff]
    %v649 = vld [vmem:[#allocation8 + $0x3b0] sm:$0xff]
    %v650 = vld [vmem:[#allocation8 + $0x3b8] sm:$0xff]
    %v651 = vld [vmem:[#allocation8 + $0x3c0] sm:$0xff]
    %v652 = vld [vmem:[#allocation8 + $0x3c8] sm:$0xff]
    %v653 = vld [vmem:[#allocation8 + $0x3d0] sm:$0xff]
    %v654 = vld [vmem:[#allocation8 + $0x3d8] sm:$0xff]
    %v655 = vld [vmem:[#allocation8 + $0x3e0] sm:$0xff]
    %v656 = vld [vmem:[#allocation8 + $0x3e8] sm:$0xff]
    %v657 = vld [vmem:[#allocation8 + $0x3f0] sm:$0xff]
    %v658 = vld [vmem:[#allocation8 + $0x3f8] sm:$0xff]
    %v659 = vld [vmem:[#allocation8 + $0x400] sm:$0xff]
    %v660 = vld [vmem:[#allocation8 + $0x408] sm:$0xff]
    %v661 = vld [vmem:[#allocation8 + $0x410] sm:$0xff]
    %v662 = vld [vmem:[#allocation8 + $0x418] sm:$0xff]
    %v663 = vld [vmem:[#allocation8 + $0x420] sm:$0xff]
    %v664 = vld [vmem:[#allocation8 + $0x428] sm:$0xff]
    %v665 = vld [vmem:[#allocation8 + $0x430] sm:$0xff]
    %v666 = vld [vmem:[#allocation8 + $0x438] sm:$0xff]
    %v667 = vld [vmem:[#allocation8 + $0x440] sm:$0xff]
    %v668 = vld [vmem:[#allocation8 + $0x448] sm:$0xff]
    %v669 = vld [vmem:[#allocation8 + $0x450] sm:$0xff]
    %v670 = vld [vmem:[#allocation8 + $0x458] sm:$0xff]
    %v671 = vld [vmem:[#allocation8 + $0x460] sm:$0xff]
    %v672 = vld [vmem:[#allocation8 + $0x468] sm:$0xff]
    %v673 = vld [vmem:[#allocation8 + $0x470] sm:$0xff]
    %v674 = vld [vmem:[#allocation8 + $0x478] sm:$0xff]
    %v675 = vld [vmem:[#allocation8 + $0x480] sm:$0xff]
    %v676 = vld [vmem:[#allocation8 + $0x488] sm:$0xff]
    %v677 = vld [vmem:[#allocation8 + $0x490] sm:$0xff]
    %v678 = vld [vmem:[#allocation8 + $0x498] sm:$0xff]
    %v679 = vld [vmem:[#allocation8 + $0x4a0] sm:$0xff]
    %v680 = vld [vmem:[#allocation8 + $0x4a8] sm:$0xff]
    %v681 = vld [vmem:[#allocation8 + $0x4b0] sm:$0xff]
    %v682 = vld [vmem:[#allocation8 + $0x4b8] sm:$0xff]
    %v683 = vld [vmem:[#allocation8 + $0x4c0] sm:$0xff]
    %v684 = vld [vmem:[#allocation8 + $0x4c8] sm:$0xff]
    %v685 = vld [vmem:[#allocation8 + $0x4d0] sm:$0xff]
    %v686 = vld [vmem:[#allocation8 + $0x4d8] sm:$0xff]
    %v687 = vld [vmem:[#allocation8 + $0x4e0] sm:$0xff]
    %v688 = vld [vmem:[#allocation8 + $0x4e8] sm:$0xff]
    %v689 = vld [vmem:[#allocation8 + $0x4f0] sm:$0xff]
    %v690 = vld [vmem:[#allocation8 + $0x4f8] sm:$0xff]
    %v691 = vld [vmem:[#allocation8 + $0x500] sm:$0xff]
    %v692 = vld [vmem:[#allocation8 + $0x508] sm:$0xff]
    %v693 = vld [vmem:[#allocation8 + $0x510] sm:$0xff]
    %v694 = vld [vmem:[#allocation8 + $0x518] sm:$0xff]
    %v695 = vld [vmem:[#allocation8 + $0x520] sm:$0xff]
    %v696 = vld [vmem:[#allocation8 + $0x528] sm:$0xff]
    %v697 = vld [vmem:[#allocation8 + $0x530] sm:$0xff]
    %v698 = vld [vmem:[#allocation8 + $0x538] sm:$0xff]
    %v699 = vld [vmem:[#allocation8 + $0x540] sm:$0xff]
    %v700 = vld [vmem:[#allocation8 + $0x548] sm:$0xff]
    %v701 = vld [vmem:[#allocation8 + $0x550] sm:$0xff]
    %v702 = vld [vmem:[#allocation8 + $0x558] sm:$0xff]
    %v703 = vld [vmem:[#allocation8 + $0x560] sm:$0xff]
    %v704 = vld [vmem:[#allocation8 + $0x568] sm:$0xff]
    %v705 = vld [vmem:[#allocation8 + $0x570] sm:$0xff]
    %v706 = vld [vmem:[#allocation8 + $0x578] sm:$0xff]
    %v707 = vld [vmem:[#allocation8 + $0x580] sm:$0xff]
    %v708 = vld [vmem:[#allocation8 + $0x588] sm:$0xff]
    %v709 = vld [vmem:[#allocation8 + $0x590] sm:$0xff]
    %v710 = vld [vmem:[#allocation8 + $0x598] sm:$0xff]
    %v711 = vld [vmem:[#allocation8 + $0x5a0] sm:$0xff]
    %v712 = vld [vmem:[#allocation8 + $0x5a8] sm:$0xff]
    %v713 = vld [vmem:[#allocation8 + $0x5b0] sm:$0xff]
    %v714 = vld [vmem:[#allocation8 + $0x5b8] sm:$0xff]
    %v715 = vld [vmem:[#allocation8 + $0x5c0] sm:$0xff]
    %v716 = vld [vmem:[#allocation8 + $0x5c8] sm:$0xff]
    %v717 = vld [vmem:[#allocation8 + $0x5d0] sm:$0xff]
    %v718 = vld [vmem:[#allocation8 + $0x5d8] sm:$0xff]
    %v719 = vld [vmem:[#allocation8 + $0x5e0] sm:$0xff]
    %v720 = vld [vmem:[#allocation8 + $0x5e8] sm:$0xff]
    %v721 = vld [vmem:[#allocation8 + $0x5f0] sm:$0xff]
    %v722 = vld [vmem:[#allocation8 + $0x5f8] sm:$0xff]
    %v723 = vld [vmem:[#allocation8 + $0x600] sm:$0xff]
    %v724 = vld [vmem:[#allocation8 + $0x608] sm:$0xff]
    %v725 = vld [vmem:[#allocation8 + $0x610] sm:$0xff]
    %v726 = vld [vmem:[#allocation8 + $0x618] sm:$0xff]
    %v727 = vld [vmem:[#allocation8 + $0x620] sm:$0xff]
    %v728 = vld [vmem:[#allocation8 + $0x628] sm:$0xff]
    %v729 = vld [vmem:[#allocation8 + $0x630] sm:$0xff]
    %v730 = vld [vmem:[#allocation8 + $0x638] sm:$0xff]
    %v731 = vld [vmem:[#allocation8 + $0x640] sm:$0xff]
    %v732 = vld [vmem:[#allocation8 + $0x648] sm:$0xff]
    %v733 = vld [vmem:[#allocation8 + $0x650] sm:$0xff]
    %v734 = vld [vmem:[#allocation8 + $0x658] sm:$0xff]
    %v735 = vld [vmem:[#allocation8 + $0x660] sm:$0xff]
    %v736 = vld [vmem:[#allocation8 + $0x668] sm:$0xff]
    %v737 = vld [vmem:[#allocation8 + $0x670] sm:$0xff]
    %v738 = vld [vmem:[#allocation8 + $0x678] sm:$0xff]
    %v739 = vld [vmem:[#allocation8 + $0x680] sm:$0xff]
    %v740 = vld [vmem:[#allocation8 + $0x688] sm:$0xff]
    %v741 = vld [vmem:[#allocation8 + $0x690] sm:$0xff]
    %v742 = vld [vmem:[#allocation8 + $0x698] sm:$0xff]
    %v743 = vld [vmem:[#allocation8 + $0x6a0] sm:$0xff]
    %v744 = vld [vmem:[#allocation8 + $0x6a8] sm:$0xff]
    %v745 = vld [vmem:[#allocation8 + $0x6b0] sm:$0xff]
    %v746 = vld [vmem:[#allocation8 + $0x6b8] sm:$0xff]
    %v747 = vld [vmem:[#allocation8 + $0x6c0] sm:$0xff]
    %v748 = vld [vmem:[#allocation8 + $0x6c8] sm:$0xff]
    %v749 = vld [vmem:[#allocation8 + $0x6d0] sm:$0xff]
    %v750 = vld [vmem:[#allocation8 + $0x6d8] sm:$0xff]
    %v751 = vld [vmem:[#allocation8 + $0x6e0] sm:$0xff]
    %v752 = vld [vmem:[#allocation8 + $0x6e8] sm:$0xff]
    %v753 = vld [vmem:[#allocation8 + $0x6f0] sm:$0xff]
    %v754 = vld [vmem:[#allocation8 + $0x6f8] sm:$0xff]
    %v755 = vld [vmem:[#allocation8 + $0x700] sm:$0xff]
    %v756 = vld [vmem:[#allocation8 + $0x708] sm:$0xff]
    %v757 = vld [vmem:[#allocation8 + $0x710] sm:$0xff]
    %v758 = vld [vmem:[#allocation8 + $0x718] sm:$0xff]
    %v759 = vld [vmem:[#allocation8 + $0x720] sm:$0xff]
    %v760 = vld [vmem:[#allocation8 + $0x728] sm:$0xff]
    %v761 = vld [vmem:[#allocation8 + $0x730] sm:$0xff]
    %v762 = vld [vmem:[#allocation8 + $0x738] sm:$0xff]
    %v763 = vld [vmem:[#allocation8 + $0x740] sm:$0xff]
    %v764 = vld [vmem:[#allocation8 + $0x748] sm:$0xff]
    %v765 = vld [vmem:[#allocation8 + $0x750] sm:$0xff]
    %v766 = vld [vmem:[#allocation8 + $0x758] sm:$0xff]
    %v767 = vld [vmem:[#allocation8 + $0x760] sm:$0xff]
    %v768 = vld [vmem:[#allocation8 + $0x768] sm:$0xff]
    %v769 = vld [vmem:[#allocation8 + $0x770] sm:$0xff]
    %v770 = vld [vmem:[#allocation8 + $0x778] sm:$0xff]
    %v771 = vld [vmem:[#allocation8 + $0x780] sm:$0xff]
    %v772 = vld [vmem:[#allocation8 + $0x788] sm:$0xff]
    %v773 = vld [vmem:[#allocation8 + $0x790] sm:$0xff]
    %v774 = vld [vmem:[#allocation8 + $0x798] sm:$0xff]
    %v775 = vld [vmem:[#allocation8 + $0x7a0] sm:$0xff]
    %v776 = vld [vmem:[#allocation8 + $0x7a8] sm:$0xff]
    %v777 = vld [vmem:[#allocation8 + $0x7b0] sm:$0xff]
    %v778 = vld [vmem:[#allocation8 + $0x7b8] sm:$0xff]
    %v779 = vld [vmem:[#allocation8 + $0x7c0] sm:$0xff]
    %v780 = vld [vmem:[#allocation8 + $0x7c8] sm:$0xff]
    %v781 = vld [vmem:[#allocation8 + $0x7d0] sm:$0xff]
    %v782 = vld [vmem:[#allocation8 + $0x7d8] sm:$0xff]
    %v783 = vld [vmem:[#allocation8 + $0x7e0] sm:$0xff]
    %v784 = vld [vmem:[#allocation8 + $0x7e8] sm:$0xff]
    %v785 = vld [vmem:[#allocation8 + $0x7f0] sm:$0xff]
    %v786 = vld [vmem:[#allocation8 + $0x7f8] sm:$0xff]
    %v787 = vld [vmem:[#allocation8 + $0x800] sm:$0xff]
    %v788 = vld [vmem:[#allocation8 + $0x808] sm:$0xff]
    %v789 = vld [vmem:[#allocation8 + $0x810] sm:$0xff]
    %v790 = vld [vmem:[#allocation8 + $0x818] sm:$0xff]
    %v791 = vld [vmem:[#allocation8 + $0x820] sm:$0xff]
    %v792 = vld [vmem:[#allocation8 + $0x828] sm:$0xff]
    %v793 = vld [vmem:[#allocation8 + $0x830] sm:$0xff]
    %v794 = vld [vmem:[#allocation8 + $0x838] sm:$0xff]
    %v795 = vld [vmem:[#allocation8 + $0x840] sm:$0xff]
    %v796 = vld [vmem:[#allocation8 + $0x848] sm:$0xff]
    %v797 = vld [vmem:[#allocation8 + $0x850] sm:$0xff]
    %v798 = vld [vmem:[#allocation8 + $0x858] sm:$0xff]
    %v799 = vld [vmem:[#allocation8 + $0x860] sm:$0xff]
    %v800 = vld [vmem:[#allocation8 + $0x868] sm:$0xff]
    %v801 = vld [vmem:[#allocation8 + $0x870] sm:$0xff]
    %v802 = vld [vmem:[#allocation8 + $0x878] sm:$0xff]
    %v803 = vld [vmem:[#allocation8 + $0x880] sm:$0xff]
    %v804 = vld [vmem:[#allocation8 + $0x888] sm:$0xff]
    %v805 = vld [vmem:[#allocation8 + $0x890] sm:$0xff]
    %v806 = vld [vmem:[#allocation8 + $0x898] sm:$0xff]
    %v807 = vld [vmem:[#allocation8 + $0x8a0] sm:$0xff]
    %v808 = vld [vmem:[#allocation8 + $0x8a8] sm:$0xff]
    %v809 = vld [vmem:[#allocation8 + $0x8b0] sm:$0xff]
    %v810 = vld [vmem:[#allocation8 + $0x8b8] sm:$0xff]
    %v811 = vld [vmem:[#allocation8 + $0x8c0] sm:$0xff]
    %v812 = vld [vmem:[#allocation8 + $0x8c8] sm:$0xff]
    %v813 = vld [vmem:[#allocation8 + $0x8d0] sm:$0xff]
    %v814 = vld [vmem:[#allocation8 + $0x8d8] sm:$0xff]
    %v815 = vld [vmem:[#allocation8 + $0x8e0] sm:$0xff]
    %v816 = vld [vmem:[#allocation8 + $0x8e8] sm:$0xff]
    %v817 = vld [vmem:[#allocation8 + $0x8f0] sm:$0xff]
    %v818 = vld [vmem:[#allocation8 + $0x8f8] sm:$0xff]
    %v819 = vld [vmem:[#allocation8 + $0x900] sm:$0xff]
    %v820 = vld [vmem:[#allocation8 + $0x908] sm:$0xff]
    %v821 = vld [vmem:[#allocation8 + $0x910] sm:$0xff]
    %v822 = vld [vmem:[#allocation8 + $0x918] sm:$0xff]
    %v823 = vld [vmem:[#allocation8 + $0x920] sm:$0xff]
    %v824 = vld [vmem:[#allocation8 + $0x928] sm:$0xff]
    %v825 = vld [vmem:[#allocation8 + $0x930] sm:$0xff]
    %v826 = vld [vmem:[#allocation8 + $0x938] sm:$0xff]
    %v827 = vld [vmem:[#allocation8 + $0x940] sm:$0xff]
    %v828 = vld [vmem:[#allocation8 + $0x948] sm:$0xff]
    %v829 = vld [vmem:[#allocation8 + $0x950] sm:$0xff]
    %v830 = vld [vmem:[#allocation8 + $0x958] sm:$0xff]
    %v831 = vld [vmem:[#allocation8 + $0x960] sm:$0xff]
    %v832 = vld [vmem:[#allocation8 + $0x968] sm:$0xff]
    %v833 = vld [vmem:[#allocation8 + $0x970] sm:$0xff]
    %v834 = vld [vmem:[#allocation8 + $0x978] sm:$0xff]
    %v835 = vld [vmem:[#allocation8 + $0x980] sm:$0xff]
    %v836 = vld [vmem:[#allocation8 + $0x988] sm:$0xff]
    %v837 = vld [vmem:[#allocation8 + $0x990] sm:$0xff]
    %v838 = vld [vmem:[#allocation8 + $0x998] sm:$0xff]
    %v839 = vld [vmem:[#allocation8 + $0x9a0] sm:$0xff]
    %v840 = vld [vmem:[#allocation8 + $0x9a8] sm:$0xff]
    %v841 = vld [vmem:[#allocation8 + $0x9b0] sm:$0xff]
    %v842 = vld [vmem:[#allocation8 + $0x9b8] sm:$0xff]
    %v843 = vld [vmem:[#allocation8 + $0x9c0] sm:$0xff]
    %v844 = vld [vmem:[#allocation8 + $0x9c8] sm:$0xff]
    %v845 = vld [vmem:[#allocation8 + $0x9d0] sm:$0xff]
    %v846 = vld [vmem:[#allocation8 + $0x9d8] sm:$0xff]
    %v847 = vld [vmem:[#allocation8 + $0x9e0] sm:$0xff]
    %v848 = vld [vmem:[#allocation8 + $0x9e8] sm:$0xff]
    %v849 = vld [vmem:[#allocation8 + $0x9f0] sm:$0xff]
    %v850 = vld [vmem:[#allocation8 + $0x9f8] sm:$0xff]
    %v851 = vld [vmem:[#allocation8 + $0xa00] sm:$0xff]
    %v852 = vld [vmem:[#allocation8 + $0xa08] sm:$0xff]
    %v853 = vld [vmem:[#allocation8 + $0xa10] sm:$0xff]
    %v854 = vld [vmem:[#allocation8 + $0xa18] sm:$0xff]
    %v855 = vld [vmem:[#allocation8 + $0xa20] sm:$0xff]
    %v856 = vld [vmem:[#allocation8 + $0xa28] sm:$0xff]
    %v857 = vld [vmem:[#allocation8 + $0xa30] sm:$0xff]
    %v858 = vld [vmem:[#allocation8 + $0xa38] sm:$0xff]
    %v859 = vld [vmem:[#allocation8 + $0xa40] sm:$0xff]
    %v860 = vld [vmem:[#allocation8 + $0xa48] sm:$0xff]
    %v861 = vld [vmem:[#allocation8 + $0xa50] sm:$0xff]
    %v862 = vld [vmem:[#allocation8 + $0xa58] sm:$0xff]
    %v863 = vld [vmem:[#allocation8 + $0xa60] sm:$0xff]
    %v864 = vld [vmem:[#allocation8 + $0xa68] sm:$0xff]
    %v865 = vld [vmem:[#allocation8 + $0xa70] sm:$0xff]
    %v866 = vld [vmem:[#allocation8 + $0xa78] sm:$0xff]
    %v867 = vld [vmem:[#allocation8 + $0xa80] sm:$0xff]
    %v868 = vld [vmem:[#allocation8 + $0xa88] sm:$0xff]
    %v869 = vld [vmem:[#allocation8 + $0xa90] sm:$0xff]
    %v870 = vld [vmem:[#allocation8 + $0xa98] sm:$0xff]
    %v871 = vld [vmem:[#allocation8 + $0xaa0] sm:$0xff]
    %v872 = vld [vmem:[#allocation8 + $0xaa8] sm:$0xff]
    %v873 = vld [vmem:[#allocation8 + $0xab0] sm:$0xff]
    %v874 = vld [vmem:[#allocation8 + $0xab8] sm:$0xff]
    %v875 = vld [vmem:[#allocation8 + $0xac0] sm:$0xff]
    %v876 = vld [vmem:[#allocation8 + $0xac8] sm:$0xff]
    %v877 = vld [vmem:[#allocation8 + $0xad0] sm:$0xff]
    %v878 = vld [vmem:[#allocation8 + $0xad8] sm:$0xff]
    %v879 = vld [vmem:[#allocation8 + $0xae0] sm:$0xff]
    %v880 = vld [vmem:[#allocation8 + $0xae8] sm:$0xff]
    %v881 = vld [vmem:[#allocation8 + $0xaf0] sm:$0xff]
    %v882 = vld [vmem:[#allocation8 + $0xaf8] sm:$0xff]
    %v883 = vld [vmem:[#allocation8 + $0xb00] sm:$0xff]
    %v884 = vld [vmem:[#allocation8 + $0xb08] sm:$0xff]
    %v885 = vld [vmem:[#allocation8 + $0xb10] sm:$0xff]
    %v886 = vld [vmem:[#allocation8 + $0xb18] sm:$0xff]
    %v887 = vld [vmem:[#allocation8 + $0xb20] sm:$0xff]
    %v888 = vld [vmem:[#allocation8 + $0xb28] sm:$0xff]
    %v889 = vld [vmem:[#allocation8 + $0xb30] sm:$0xff]
    %v890 = vld [vmem:[#allocation8 + $0xb38] sm:$0xff]
    %v891 = vld [vmem:[#allocation8 + $0xb40] sm:$0xff]
    %v892 = vld [vmem:[#allocation8 + $0xb48] sm:$0xff]
    %v893 = vld [vmem:[#allocation8 + $0xb50] sm:$0xff]
    %v894 = vld [vmem:[#allocation8 + $0xb58] sm:$0xff]
    %v895 = vld [vmem:[#allocation8 + $0xb60] sm:$0xff]
    %v896 = vld [vmem:[#allocation8 + $0xb68] sm:$0xff]
    %v897 = vld [vmem:[#allocation8 + $0xb70] sm:$0xff]
    %v898 = vld [vmem:[#allocation8 + $0xb78] sm:$0xff]
    %v899 = vld [vmem:[#allocation8 + $0xb80] sm:$0xff]
    %v900 = vld [vmem:[#allocation8 + $0xb88] sm:$0xff]
    %v901 = vld [vmem:[#allocation8 + $0xb90] sm:$0xff]
    %v902 = vld [vmem:[#allocation8 + $0xb98] sm:$0xff]
    %v903 = vld [vmem:[#allocation8 + $0xba0] sm:$0xff]
    %v904 = vld [vmem:[#allocation8 + $0xba8] sm:$0xff]
    %v905 = vld [vmem:[#allocation8 + $0xbb0] sm:$0xff]
    %v906 = vld [vmem:[#allocation8 + $0xbb8] sm:$0xff]
    %v907 = vld [vmem:[#allocation8 + $0xbc0] sm:$0xff]
    %v908 = vld [vmem:[#allocation8 + $0xbc8] sm:$0xff]
    %v909 = vld [vmem:[#allocation8 + $0xbd0] sm:$0xff]
    %v910 = vld [vmem:[#allocation8 + $0xbd8] sm:$0xff]
    %v911 = vld [vmem:[#allocation8 + $0xbe0] sm:$0xff]
    %v912 = vld [vmem:[#allocation8 + $0xbe8] sm:$0xff]
    %v913 = vld [vmem:[#allocation8 + $0xbf0] sm:$0xff]
    %v914 = vld [vmem:[#allocation8 + $0xbf8] sm:$0xff]
    %v915 = vld [vmem:[#allocation8 + $0xc00] sm:$0xff]
    %v916 = vld [vmem:[#allocation8 + $0xc08] sm:$0xff]
    %v917 = vld [vmem:[#allocation8 + $0xc10] sm:$0xff]
    %v918 = vld [vmem:[#allocation8 + $0xc18] sm:$0xff]
    %v919 = vld [vmem:[#allocation8 + $0xc20] sm:$0xff]
    %v920 = vld [vmem:[#allocation8 + $0xc28] sm:$0xff]
    %v921 = vld [vmem:[#allocation8 + $0xc30] sm:$0xff]
    %v922 = vld [vmem:[#allocation8 + $0xc38] sm:$0xff]
    %v923 = vld [vmem:[#allocation8 + $0xc40] sm:$0xff]
    %v924 = vld [vmem:[#allocation8 + $0xc48] sm:$0xff]
    %v925 = vld [vmem:[#allocation8 + $0xc50] sm:$0xff]
    %v926 = vld [vmem:[#allocation8 + $0xc58] sm:$0xff]
    %v927 = vld [vmem:[#allocation8 + $0xc60] sm:$0xff]
    %v928 = vld [vmem:[#allocation8 + $0xc68] sm:$0xff]
    %v929 = vld [vmem:[#allocation8 + $0xc70] sm:$0xff]
    %v930 = vld [vmem:[#allocation8 + $0xc78] sm:$0xff]
    %v931 = vld [vmem:[#allocation8 + $0xc80] sm:$0xff]
    %v932 = vld [vmem:[#allocation8 + $0xc88] sm:$0xff]
    %v933 = vld [vmem:[#allocation8 + $0xc90] sm:$0xff]
    %v934 = vld [vmem:[#allocation8 + $0xc98] sm:$0xff]
    %v935 = vld [vmem:[#allocation8 + $0xca0] sm:$0xff]
    %v936 = vld [vmem:[#allocation8 + $0xca8] sm:$0xff]
    %v937 = vld [vmem:[#allocation8 + $0xcb0] sm:$0xff]
    %v938 = vld [vmem:[#allocation8 + $0xcb8] sm:$0xff]
    %v939 = vld [vmem:[#allocation8 + $0xcc0] sm:$0xff]
    %v940 = vld [vmem:[#allocation8 + $0xcc8] sm:$0xff]
    %v941 = vld [vmem:[#allocation8 + $0xcd0] sm:$0xff]
    %v942 = vld [vmem:[#allocation8 + $0xcd8] sm:$0xff]
    %v943 = vld [vmem:[#allocation8 + $0xce0] sm:$0xff]
    %v944 = vld [vmem:[#allocation8 + $0xce8] sm:$0xff]
    %v945 = vld [vmem:[#allocation8 + $0xcf0] sm:$0xff]
    %v946 = vld [vmem:[#allocation8 + $0xcf8] sm:$0xff]
    %v947 = vld [vmem:[#allocation8 + $0xd00] sm:$0xff]
    %v948 = vld [vmem:[#allocation8 + $0xd08] sm:$0xff]
    %v949 = vld [vmem:[#allocation8 + $0xd10] sm:$0xff]
    %v950 = vld [vmem:[#allocation8 + $0xd18] sm:$0xff]
    %v951 = vld [vmem:[#allocation8 + $0xd20] sm:$0xff]
    %v952 = vld [vmem:[#allocation8 + $0xd28] sm:$0xff]
    %v953 = vld [vmem:[#allocation8 + $0xd30] sm:$0xff]
    %v954 = vld [vmem:[#allocation8 + $0xd38] sm:$0xff]
    %v955 = vld [vmem:[#allocation8 + $0xd40] sm:$0xff]
    %v956 = vld [vmem:[#allocation8 + $0xd48] sm:$0xff]
    %v957 = vld [vmem:[#allocation8 + $0xd50] sm:$0xff]
    %v958 = vld [vmem:[#allocation8 + $0xd58] sm:$0xff]
    %v959 = vld [vmem:[#allocation8 + $0xd60] sm:$0xff]
    %v960 = vld [vmem:[#allocation8 + $0xd68] sm:$0xff]
    %v961 = vld [vmem:[#allocation8 + $0xd70] sm:$0xff]
    %v962 = vld [vmem:[#allocation8 + $0xd78] sm:$0xff]
    %v963 = vld [vmem:[#allocation8 + $0xd80] sm:$0xff]
    %v964 = vld [vmem:[#allocation8 + $0xd88] sm:$0xff]
    %v965 = vld [vmem:[#allocation8 + $0xd90] sm:$0xff]
    %v966 = vld [vmem:[#allocation8 + $0xd98] sm:$0xff]
    %v967 = vld [vmem:[#allocation8 + $0xda0] sm:$0xff]
    %v968 = vld [vmem:[#allocation8 + $0xda8] sm:$0xff]
    %v969 = vld [vmem:[#allocation8 + $0xdb0] sm:$0xff]
    %v970 = vld [vmem:[#allocation8 + $0xdb8] sm:$0xff]
    %v971 = vld [vmem:[#allocation8 + $0xdc0] sm:$0xff]
    %v972 = vld [vmem:[#allocation8 + $0xdc8] sm:$0xff]
    %v973 = vld [vmem:[#allocation8 + $0xdd0] sm:$0xff]
    %v974 = vld [vmem:[#allocation8 + $0xdd8] sm:$0xff]
    %v975 = vld [vmem:[#allocation8 + $0xde0] sm:$0xff]
    %v976 = vld [vmem:[#allocation8 + $0xde8] sm:$0xff]
    %v977 = vld [vmem:[#allocation8 + $0xdf0] sm:$0xff]
    %v978 = vld [vmem:[#allocation8 + $0xdf8] sm:$0xff]
    %v979 = vld [vmem:[#allocation8 + $0xe00] sm:$0xff]
    %v980 = vld [vmem:[#allocation8 + $0xe08] sm:$0xff]
    %v981 = vld [vmem:[#allocation8 + $0xe10] sm:$0xff]
    %v982 = vld [vmem:[#allocation8 + $0xe18] sm:$0xff]
    %v983 = vld [vmem:[#allocation8 + $0xe20] sm:$0xff]
    %v984 = vld [vmem:[#allocation8 + $0xe28] sm:$0xff]
    %v985 = vld [vmem:[#allocation8 + $0xe30] sm:$0xff]
    %v986 = vld [vmem:[#allocation8 + $0xe38] sm:$0xff]
    %v987 = vld [vmem:[#allocation8 + $0xe40] sm:$0xff]
    %v988 = vld [vmem:[#allocation8 + $0xe48] sm:$0xff]
    %v989 = vld [vmem:[#allocation8 + $0xe50] sm:$0xff]
    %v990 = vld [vmem:[#allocation8 + $0xe58] sm:$0xff]
    %v991 = vld [vmem:[#allocation8 + $0xe60] sm:$0xff]
    %v992 = vld [vmem:[#allocation8 + $0xe68] sm:$0xff]
    %v993 = vld [vmem:[#allocation8 + $0xe70] sm:$0xff]
    %v994 = vld [vmem:[#allocation8 + $0xe78] sm:$0xff]
    %v995 = vld [vmem:[#allocation8 + $0xe80] sm:$0xff]
    %v996 = vld [vmem:[#allocation8 + $0xe88] sm:$0xff]
    %v997 = vld [vmem:[#allocation8 + $0xe90] sm:$0xff]
    %v998 = vld [vmem:[#allocation8 + $0xe98] sm:$0xff]
    %v999 = vld [vmem:[#allocation8 + $0xea0] sm:$0xff]
    %v1000 = vld [vmem:[#allocation8 + $0xea8] sm:$0xff]
    %v1001 = vld [vmem:[#allocation8 + $0xeb0] sm:$0xff]
    %v1002 = vld [vmem:[#allocation8 + $0xeb8] sm:$0xff]
    %v1003 = vld [vmem:[#allocation8 + $0xec0] sm:$0xff]
    %v1004 = vld [vmem:[#allocation8 + $0xec8] sm:$0xff]
    %v1005 = vld [vmem:[#allocation8 + $0xed0] sm:$0xff]
    %v1006 = vld [vmem:[#allocation8 + $0xed8] sm:$0xff]
    %v1007 = vld [vmem:[#allocation8 + $0xee0] sm:$0xff]
    %v1008 = vld [vmem:[#allocation8 + $0xee8] sm:$0xff]
    %v1009 = vld [vmem:[#allocation8 + $0xef0] sm:$0xff]
    %v1010 = vld [vmem:[#allocation8 + $0xef8] sm:$0xff]
    %v1011 = vld [vmem:[#allocation8 + $0xf00] sm:$0xff]
    %v1012 = vld [vmem:[#allocation8 + $0xf08] sm:$0xff]
    %v1013 = vld [vmem:[#allocation8 + $0xf10] sm:$0xff]
    %v1014 = vld [vmem:[#allocation8 + $0xf18] sm:$0xff]
    %v1015 = vld [vmem:[#allocation8 + $0xf20] sm:$0xff]
    %v1016 = vld [vmem:[#allocation8 + $0xf28] sm:$0xff]
    %v1017 = vld [vmem:[#allocation8 + $0xf30] sm:$0xff]
    %v1018 = vld [vmem:[#allocation8 + $0xf38] sm:$0xff]
    %v1019 = vld [vmem:[#allocation8 + $0xf40] sm:$0xff]
    %v1020 = vld [vmem:[#allocation8 + $0xf48] sm:$0xff]
    %v1021 = vld [vmem:[#allocation8 + $0xf50] sm:$0xff]
    %v1022 = vld [vmem:[#allocation8 + $0xf58] sm:$0xff]
    %v1023 = vld [vmem:[#allocation8 + $0xf60] sm:$0xff]
    %v1024 = vld [vmem:[#allocation8 + $0xf68] sm:$0xff]
    %v1025 = vld [vmem:[#allocation8 + $0xf70] sm:$0xff]
    %v1026 = vld [vmem:[#allocation8 + $0xf78] sm:$0xff]
    %v1027 = vld [vmem:[#allocation8 + $0xf80] sm:$0xff]
    %v1028 = vld [vmem:[#allocation8 + $0xf88] sm:$0xff]
    %v1029 = vld [vmem:[#allocation8 + $0xf90] sm:$0xff]
    %v1030 = vld [vmem:[#allocation8 + $0xf98] sm:$0xff]
    %v1031 = vld [vmem:[#allocation8 + $0xfa0] sm:$0xff]
    %v1032 = vld [vmem:[#allocation8 + $0xfa8] sm:$0xff]
    %v1033 = vld [vmem:[#allocation8 + $0xfb0] sm:$0xff]
    %v1034 = vld [vmem:[#allocation8 + $0xfb8] sm:$0xff]
    %v1035 = vld [vmem:[#allocation8 + $0xfc0] sm:$0xff]
    %v1036 = vld [vmem:[#allocation8 + $0xfc8] sm:$0xff]
    %v1037 = vld [vmem:[#allocation8 + $0xfd0] sm:$0xff]
    %v1038 = vld [vmem:[#allocation8 + $0xfd8] sm:$0xff]
    %v1039 = vld [vmem:[#allocation8 + $0xfe0] sm:$0xff]
    %v1040 = vld [vmem:[#allocation8 + $0xfe8] sm:$0xff]
    %v1041 = vld [vmem:[#allocation8 + $0xff0] sm:$0xff]
    %v1042 = vld [vmem:[#allocation8 + $0xff8] sm:$0xff]
    %v1043 = vld [vmem:[#allocation8 + $0x1000] sm:$0xff]
    %v1044 = vld [vmem:[#allocation8 + $0x1008] sm:$0xff]
    %v1045 = vld [vmem:[#allocation8 + $0x1010] sm:$0xff]
    %v1046 = vld [vmem:[#allocation8 + $0x1018] sm:$0xff]
    %v1047 = vld [vmem:[#allocation8 + $0x1020] sm:$0xff]
    %v1048 = vld [vmem:[#allocation8 + $0x1028] sm:$0xff]
    %v1049 = vld [vmem:[#allocation8 + $0x1030] sm:$0xff]
    %v1050 = vld [vmem:[#allocation8 + $0x1038] sm:$0xff]
    %v1051 = vld [vmem:[#allocation8 + $0x1040] sm:$0xff]
    %v1052 = vld [vmem:[#allocation8 + $0x1048] sm:$0xff]
    %v1053 = vld [vmem:[#allocation8 + $0x1050] sm:$0xff]
    %v1054 = vld [vmem:[#allocation8 + $0x1058] sm:$0xff]
    %v1055 = vld [vmem:[#allocation8 + $0x1060] sm:$0xff]
    %v1056 = vld [vmem:[#allocation8 + $0x1068] sm:$0xff]
    %v1057 = vld [vmem:[#allocation8 + $0x1070] sm:$0xff]
    %v1058 = vld [vmem:[#allocation8 + $0x1078] sm:$0xff]
    %v1059 = vld [vmem:[#allocation8 + $0x1080] sm:$0xff]
    %v1060 = vld [vmem:[#allocation8 + $0x1088] sm:$0xff]
    %v1061 = vld [vmem:[#allocation8 + $0x1090] sm:$0xff]
    %v1062 = vld [vmem:[#allocation8 + $0x1098] sm:$0xff]
    %v1063 = vld [vmem:[#allocation8 + $0x10a0] sm:$0xff]
    %v1064 = vld [vmem:[#allocation8 + $0x10a8] sm:$0xff]
    %v1065 = vld [vmem:[#allocation8 + $0x10b0] sm:$0xff]
    %v1066 = vld [vmem:[#allocation8 + $0x10b8] sm:$0xff]
    %v1067 = vld [vmem:[#allocation8 + $0x10c0] sm:$0xff]
    %v1068 = vld [vmem:[#allocation8 + $0x10c8] sm:$0xff]
    %v1069 = vld [vmem:[#allocation8 + $0x10d0] sm:$0xff]
    %v1070 = vld [vmem:[#allocation8 + $0x10d8] sm:$0xff]
    %v1071 = vld [vmem:[#allocation8 + $0x10e0] sm:$0xff]
    %v1072 = vld [vmem:[#allocation8 + $0x10e8] sm:$0xff]
    %v1073 = vld [vmem:[#allocation8 + $0x10f0] sm:$0xff]
    %v1074 = vld [vmem:[#allocation8 + $0x10f8] sm:$0xff]
    %v1075 = vld [vmem:[#allocation8 + $0x1100] sm:$0xff]
    %v1076 = vld [vmem:[#allocation8 + $0x1108] sm:$0xff]
    %v1077 = vld [vmem:[#allocation8 + $0x1110] sm:$0xff]
    %v1078 = vld [vmem:[#allocation8 + $0x1118] sm:$0xff]
    %v1079 = vld [vmem:[#allocation8 + $0x1120] sm:$0xff]
    %v1080 = vld [vmem:[#allocation8 + $0x1128] sm:$0xff]
    %v1081 = vld [vmem:[#allocation8 + $0x1130] sm:$0xff]
    %v1082 = vld [vmem:[#allocation8 + $0x1138] sm:$0xff]
    %v1083 = vld [vmem:[#allocation8 + $0x1140] sm:$0xff]
    %v1084 = vld [vmem:[#allocation8 + $0x1148] sm:$0xff]
    %v1085 = vld [vmem:[#allocation8 + $0x1150] sm:$0xff]
    %v1086 = vld [vmem:[#allocation8 + $0x1158] sm:$0xff]
    %v1087 = vld [vmem:[#allocation8 + $0x1160] sm:$0xff]
    %v1088 = vld [vmem:[#allocation8 + $0x1168] sm:$0xff]
    %v1089 = vld [vmem:[#allocation8 + $0x1170] sm:$0xff]
    %v1090 = vld [vmem:[#allocation8 + $0x1178] sm:$0xff]
    %v1091 = vld [vmem:[#allocation8 + $0x1180] sm:$0xff]
    %v1092 = vld [vmem:[#allocation8 + $0x1188] sm:$0xff]
    %v1093 = vld [vmem:[#allocation8 + $0x1190] sm:$0xff]
    %v1094 = vld [vmem:[#allocation8 + $0x1198] sm:$0xff]
    %v1095 = vld [vmem:[#allocation8 + $0x11a0] sm:$0xff]
    %v1096 = vld [vmem:[#allocation8 + $0x11a8] sm:$0xff]
    %v1097 = vld [vmem:[#allocation8 + $0x11b0] sm:$0xff]
    %v1098 = vld [vmem:[#allocation8 + $0x11b8] sm:$0xff]
    %v1099 = vld [vmem:[#allocation8 + $0x11c0] sm:$0xff]
    %v1100 = vld [vmem:[#allocation8 + $0x11c8] sm:$0xff]
    %v1101 = vld [vmem:[#allocation8 + $0x11d0] sm:$0xff]
    %v1102 = vld [vmem:[#allocation8 + $0x11d8] sm:$0xff]
    %v1103 = vld [vmem:[#allocation8 + $0x11e0] sm:$0xff]
    %v1104 = vld [vmem:[#allocation8 + $0x11e8] sm:$0xff]
    %v1105 = vld [vmem:[#allocation8 + $0x11f0] sm:$0xff]
    %v1106 = vld [vmem:[#allocation8 + $0x11f8] sm:$0xff]
    %v1107 = vld [vmem:[#allocation8 + $0x1200] sm:$0xff]
    %v1108 = vld [vmem:[#allocation8 + $0x1208] sm:$0xff]
    %v1109 = vld [vmem:[#allocation8 + $0x1210] sm:$0xff]
    %v1110 = vld [vmem:[#allocation8 + $0x1218] sm:$0xff]
    %v1111 = vld [vmem:[#allocation8 + $0x1220] sm:$0xff]
    %v1112 = vld [vmem:[#allocation8 + $0x1228] sm:$0xff]
    %v1113 = vld [vmem:[#allocation8 + $0x1230] sm:$0xff]
    %v1114 = vld [vmem:[#allocation8 + $0x1238] sm:$0xff]
    %v1115 = vld [vmem:[#allocation8 + $0x1240] sm:$0xff]
    %v1116 = vld [vmem:[#allocation8 + $0x1248] sm:$0xff]
    %v1117 = vld [vmem:[#allocation8 + $0x1250] sm:$0xff]
    %v1118 = vld [vmem:[#allocation8 + $0x1258] sm:$0xff]
    %v1119 = vld [vmem:[#allocation8 + $0x1260] sm:$0xff]
    %v1120 = vld [vmem:[#allocation8 + $0x1268] sm:$0xff]
    %v1121 = vld [vmem:[#allocation8 + $0x1270] sm:$0xff]
    %v1122 = vld [vmem:[#allocation8 + $0x1278] sm:$0xff]
    %v1123 = vld [vmem:[#allocation8 + $0x1280] sm:$0xff]
    %v1124 = vld [vmem:[#allocation8 + $0x1288] sm:$0xff]
    %v1125 = vld [vmem:[#allocation8 + $0x1290] sm:$0xff]
    %v1126 = vld [vmem:[#allocation8 + $0x1298] sm:$0xff]
    %v1127 = vld [vmem:[#allocation8 + $0x12a0] sm:$0xff]
    %v1128 = vld [vmem:[#allocation8 + $0x12a8] sm:$0xff]
    %v1129 = vld [vmem:[#allocation8 + $0x12b0] sm:$0xff]
    %v1130 = vld [vmem:[#allocation8 + $0x12b8] sm:$0xff]
    %v1131 = vld [vmem:[#allocation8 + $0x12c0] sm:$0xff]
    %v1132 = vld [vmem:[#allocation8 + $0x12c8] sm:$0xff]
    %v1133 = vld [vmem:[#allocation8 + $0x12d0] sm:$0xff]
    %v1134 = vld [vmem:[#allocation8 + $0x12d8] sm:$0xff]
    %v1135 = vld [vmem:[#allocation8 + $0x12e0] sm:$0xff]
    %v1136 = vld [vmem:[#allocation8 + $0x12e8] sm:$0xff]
    %v1137 = vld [vmem:[#allocation8 + $0x12f0] sm:$0xff]
    %v1138 = vld [vmem:[#allocation8 + $0x12f8] sm:$0xff]
    %v1139 = vld [vmem:[#allocation8 + $0x1300] sm:$0xff]
    %v1140 = vld [vmem:[#allocation8 + $0x1308] sm:$0xff]
    %v1141 = vld [vmem:[#allocation8 + $0x1310] sm:$0xff]
    %v1142 = vld [vmem:[#allocation8 + $0x1318] sm:$0xff]
    %v1143 = vld [vmem:[#allocation8 + $0x1320] sm:$0xff]
    %v1144 = vld [vmem:[#allocation8 + $0x1328] sm:$0xff]
    %v1145 = vld [vmem:[#allocation8 + $0x1330] sm:$0xff]
    %v1146 = vld [vmem:[#allocation8 + $0x1338] sm:$0xff]
    %v1147 = vld [vmem:[#allocation8 + $0x1340] sm:$0xff]
    %v1148 = vld [vmem:[#allocation8 + $0x1348] sm:$0xff]
    %v1149 = vld [vmem:[#allocation8 + $0x1350] sm:$0xff]
    %v1150 = vld [vmem:[#allocation8 + $0x1358] sm:$0xff]
    %v1151 = vld [vmem:[#allocation8 + $0x1360] sm:$0xff]
    %v1152 = vld [vmem:[#allocation8 + $0x1368] sm:$0xff]
    %v1153 = vld [vmem:[#allocation8 + $0x1370] sm:$0xff]
    %v1154 = vld [vmem:[#allocation8 + $0x1378] sm:$0xff]
    %v1155 = vld [vmem:[#allocation8 + $0x1380] sm:$0xff]
    %v1156 = vld [vmem:[#allocation8 + $0x1388] sm:$0xff]
    %v1157 = vld [vmem:[#allocation8 + $0x1390] sm:$0xff]
    %v1158 = vld [vmem:[#allocation8 + $0x1398] sm:$0xff]
    %v1159 = vld [vmem:[#allocation8 + $0x13a0] sm:$0xff]
    %v1160 = vld [vmem:[#allocation8 + $0x13a8] sm:$0xff]
    %v1161 = vld [vmem:[#allocation8 + $0x13b0] sm:$0xff]
    %v1162 = vld [vmem:[#allocation8 + $0x13b8] sm:$0xff]
    %v1163 = vld [vmem:[#allocation8 + $0x13c0] sm:$0xff]
    %v1164 = vld [vmem:[#allocation8 + $0x13c8] sm:$0xff]
    %v1165 = vld [vmem:[#allocation8 + $0x13d0] sm:$0xff]
    %v1166 = vld [vmem:[#allocation8 + $0x13d8] sm:$0xff]
    %v1167 = vld [vmem:[#allocation8 + $0x13e0] sm:$0xff]
    %v1168 = vld [vmem:[#allocation8 + $0x13e8] sm:$0xff]
    %v1169 = vld [vmem:[#allocation8 + $0x13f0] sm:$0xff]
    %v1170 = vld [vmem:[#allocation8 + $0x13f8] sm:$0xff]
    %v1171 = vld [vmem:[#allocation8 + $0x1400] sm:$0xff]
    %v1172 = vld [vmem:[#allocation8 + $0x1408] sm:$0xff]
    %v1173 = vld [vmem:[#allocation8 + $0x1410] sm:$0xff]
    %v1174 = vld [vmem:[#allocation8 + $0x1418] sm:$0xff]
    %v1175 = vld [vmem:[#allocation8 + $0x1420] sm:$0xff]
    %v1176 = vld [vmem:[#allocation8 + $0x1428] sm:$0xff]
    %v1177 = vld [vmem:[#allocation8 + $0x1430] sm:$0xff]
    %v1178 = vld [vmem:[#allocation8 + $0x1438] sm:$0xff]
    %v1179 = vld [vmem:[#allocation8 + $0x1440] sm:$0xff]
    %v1180 = vld [vmem:[#allocation8 + $0x1448] sm:$0xff]
    %v1181 = vld [vmem:[#allocation8 + $0x1450] sm:$0xff]
    %v1182 = vld [vmem:[#allocation8 + $0x1458] sm:$0xff]
    %v1183 = vld [vmem:[#allocation8 + $0x1460] sm:$0xff]
    %v1184 = vld [vmem:[#allocation8 + $0x1468] sm:$0xff]
    %v1185 = vld [vmem:[#allocation8 + $0x1470] sm:$0xff]
    %v1186 = vld [vmem:[#allocation8 + $0x1478] sm:$0xff]
    %v1187 = vld [vmem:[#allocation8 + $0x1480] sm:$0xff]
    %v1188 = vld [vmem:[#allocation8 + $0x1488] sm:$0xff]
    %v1189 = vld [vmem:[#allocation8 + $0x1490] sm:$0xff]
    %v1190 = vld [vmem:[#allocation8 + $0x1498] sm:$0xff]
    %v1191 = vld [vmem:[#allocation8 + $0x14a0] sm:$0xff]
    %v1192 = vld [vmem:[#allocation8 + $0x14a8] sm:$0xff]
    %v1193 = vld [vmem:[#allocation8 + $0x14b0] sm:$0xff]
    %v1194 = vld [vmem:[#allocation8 + $0x14b8] sm:$0xff]
    %v1195 = vld [vmem:[#allocation8 + $0x14c0] sm:$0xff]
    %v1196 = vld [vmem:[#allocation8 + $0x14c8] sm:$0xff]
    %v1197 = vld [vmem:[#allocation8 + $0x14d0] sm:$0xff]
    %v1198 = vld [vmem:[#allocation8 + $0x14d8] sm:$0xff]
    %v1199 = vld [vmem:[#allocation8 + $0x14e0] sm:$0xff]
    %v1200 = vld [vmem:[#allocation8 + $0x14e8] sm:$0xff]
    %v1201 = vld [vmem:[#allocation8 + $0x14f0] sm:$0xff]
    %v1202 = vld [vmem:[#allocation8 + $0x14f8] sm:$0xff]
    %v1203 = vld [vmem:[#allocation8 + $0x1500] sm:$0xff]
    %v1204 = vld [vmem:[#allocation8 + $0x1508] sm:$0xff]
    %v1205 = vld [vmem:[#allocation8 + $0x1510] sm:$0xff]
    %v1206 = vld [vmem:[#allocation8 + $0x1518] sm:$0xff]
    %v1207 = vld [vmem:[#allocation8 + $0x1520] sm:$0xff]
    %v1208 = vld [vmem:[#allocation8 + $0x1528] sm:$0xff]
    %v1209 = vld [vmem:[#allocation8 + $0x1530] sm:$0xff]
    %v1210 = vld [vmem:[#allocation8 + $0x1538] sm:$0xff]
    %v1211 = vld [vmem:[#allocation8 + $0x1540] sm:$0xff]
    %v1212 = vld [vmem:[#allocation8 + $0x1548] sm:$0xff]
    %v1213 = vld [vmem:[#allocation8 + $0x1550] sm:$0xff]
    %v1214 = vld [vmem:[#allocation8 + $0x1558] sm:$0xff]
    %v1215 = vld [vmem:[#allocation8 + $0x1560] sm:$0xff]
    %v1216 = vld [vmem:[#allocation8 + $0x1568] sm:$0xff]
    %v1217 = vld [vmem:[#allocation8 + $0x1570] sm:$0xff]
    %v1218 = vld [vmem:[#allocation8 + $0x1578] sm:$0xff]
    %v1219 = vld [vmem:[#allocation8 + $0x1580] sm:$0xff]
    %v1220 = vld [vmem:[#allocation8 + $0x1588] sm:$0xff]
    %v1221 = vld [vmem:[#allocation8 + $0x1590] sm:$0xff]
    %v1222 = vld [vmem:[#allocation8 + $0x1598] sm:$0xff]
    %v1223 = vld [vmem:[#allocation8 + $0x15a0] sm:$0xff]
    %v1224 = vld [vmem:[#allocation8 + $0x15a8] sm:$0xff]
    %v1225 = vld [vmem:[#allocation8 + $0x15b0] sm:$0xff]
    %v1226 = vld [vmem:[#allocation8 + $0x15b8] sm:$0xff]
    %v1227 = vld [vmem:[#allocation8 + $0x15c0] sm:$0xff]
    %v1228 = vld [vmem:[#allocation8 + $0x15c8] sm:$0xff]
    %v1229 = vld [vmem:[#allocation8 + $0x15d0] sm:$0xff]
    %v1230 = vld [vmem:[#allocation8 + $0x15d8] sm:$0xff]
    %v1231 = vld [vmem:[#allocation8 + $0x15e0] sm:$0xff]
    %v1232 = vld [vmem:[#allocation8 + $0x15e8] sm:$0xff]
    %v1233 = vld [vmem:[#allocation8 + $0x15f0] sm:$0xff]
    %v1234 = vld [vmem:[#allocation8 + $0x15f8] sm:$0xff]
    %v1235 = vld [vmem:[#allocation8 + $0x1600] sm:$0xff]
    %v1236 = vld [vmem:[#allocation8 + $0x1608] sm:$0xff]
    %v1237 = vld [vmem:[#allocation8 + $0x1610] sm:$0xff]
    %v1238 = vld [vmem:[#allocation8 + $0x1618] sm:$0xff]
    %v1239 = vld [vmem:[#allocation8 + $0x1620] sm:$0xff]
    %v1240 = vld [vmem:[#allocation8 + $0x1628] sm:$0xff]
    %v1241 = vld [vmem:[#allocation8 + $0x1630] sm:$0xff]
    %v1242 = vld [vmem:[#allocation8 + $0x1638] sm:$0xff]
    %v1243 = vld [vmem:[#allocation8 + $0x1640] sm:$0xff]
    %v1244 = vld [vmem:[#allocation8 + $0x1648] sm:$0xff]
    %v1245 = vld [vmem:[#allocation8 + $0x1650] sm:$0xff]
    %v1246 = vld [vmem:[#allocation8 + $0x1658] sm:$0xff]
    %v1247 = vld [vmem:[#allocation8 + $0x1660] sm:$0xff]
    %v1248 = vld [vmem:[#allocation8 + $0x1668] sm:$0xff]
    %v1249 = vld [vmem:[#allocation8 + $0x1670] sm:$0xff]
    %v1250 = vld [vmem:[#allocation8 + $0x1678] sm:$0xff]
    %v1251 = vld [vmem:[#allocation8 + $0x1680] sm:$0xff]
    %v1252 = vld [vmem:[#allocation8 + $0x1688] sm:$0xff]
    %v1253 = vld [vmem:[#allocation8 + $0x1690] sm:$0xff]
    %v1254 = vld [vmem:[#allocation8 + $0x1698] sm:$0xff]
    %v1255 = vld [vmem:[#allocation8 + $0x16a0] sm:$0xff]
    %v1256 = vld [vmem:[#allocation8 + $0x16a8] sm:$0xff]
    %v1257 = vld [vmem:[#allocation8 + $0x16b0] sm:$0xff]
    %v1258 = vld [vmem:[#allocation8 + $0x16b8] sm:$0xff]
    %v1259 = vld [vmem:[#allocation8 + $0x16c0] sm:$0xff]
    %v1260 = vld [vmem:[#allocation8 + $0x16c8] sm:$0xff]
    %v1261 = vld [vmem:[#allocation8 + $0x16d0] sm:$0xff]
    %v1262 = vld [vmem:[#allocation8 + $0x16d8] sm:$0xff]
    %v1263 = vld [vmem:[#allocation8 + $0x16e0] sm:$0xff]
    %v1264 = vld [vmem:[#allocation8 + $0x16e8] sm:$0xff]
    %v1265 = vld [vmem:[#allocation8 + $0x16f0] sm:$0xff]
    %v1266 = vld [vmem:[#allocation8 + $0x16f8] sm:$0xff]
    %v1267 = vld [vmem:[#allocation8 + $0x1700] sm:$0xff]
    %v1268 = vld [vmem:[#allocation8 + $0x1708] sm:$0xff]
    %v1269 = vld [vmem:[#allocation8 + $0x1710] sm:$0xff]
    %v1270 = vld [vmem:[#allocation8 + $0x1718] sm:$0xff]
    %v1271 = vld [vmem:[#allocation8 + $0x1720] sm:$0xff]
    %v1272 = vld [vmem:[#allocation8 + $0x1728] sm:$0xff]
    %v1273 = vld [vmem:[#allocation8 + $0x1730] sm:$0xff]
    %v1274 = vld [vmem:[#allocation8 + $0x1738] sm:$0xff]
    %v1275 = vld [vmem:[#allocation8 + $0x1740] sm:$0xff]
    %v1276 = vld [vmem:[#allocation8 + $0x1748] sm:$0xff]
    %v1277 = vld [vmem:[#allocation8 + $0x1750] sm:$0xff]
    %v1278 = vld [vmem:[#allocation8 + $0x1758] sm:$0xff]
    %v1279 = vld [vmem:[#allocation8 + $0x1760] sm:$0xff]
    %v1280 = vld [vmem:[#allocation8 + $0x1768] sm:$0xff]
    %v1281 = vld [vmem:[#allocation8 + $0x1770] sm:$0xff]
    %v1282 = vld [vmem:[#allocation8 + $0x1778] sm:$0xff]
    %v1283 = vld [vmem:[#allocation8 + $0x1780] sm:$0xff]
    %v1284 = vld [vmem:[#allocation8 + $0x1788] sm:$0xff]
    %v1285 = vld [vmem:[#allocation8 + $0x1790] sm:$0xff]
    %v1286 = vld [vmem:[#allocation8 + $0x1798] sm:$0xff]
    %v1287 = vld [vmem:[#allocation8 + $0x17a0] sm:$0xff]
    %v1288 = vld [vmem:[#allocation8 + $0x17a8] sm:$0xff]
    %v1289 = vld [vmem:[#allocation8 + $0x17b0] sm:$0xff]
    %v1290 = vld [vmem:[#allocation8 + $0x17b8] sm:$0xff]
    %v1291 = vld [vmem:[#allocation8 + $0x17c0] sm:$0xff]
    %v1292 = vld [vmem:[#allocation8 + $0x17c8] sm:$0xff]
    %v1293 = vld [vmem:[#allocation8 + $0x17d0] sm:$0xff]
    %v1294 = vld [vmem:[#allocation8 + $0x17d8] sm:$0xff]
    %v1295 = vld [vmem:[#allocation8 + $0x17e0] sm:$0xff]
    %v1296 = vld [vmem:[#allocation8 + $0x17e8] sm:$0xff]
    %v1297 = vld [vmem:[#allocation8 + $0x17f0] sm:$0xff]
    %v1298 = vld [vmem:[#allocation8 + $0x17f8] sm:$0xff]
    %v1299 = vld [vmem:[#allocation8 + $0x1800] sm:$0xff]
    %v1300 = vld [vmem:[#allocation8 + $0x1808] sm:$0xff]
    %v1301 = vld [vmem:[#allocation8 + $0x1810] sm:$0xff]
    %v1302 = vld [vmem:[#allocation8 + $0x1818] sm:$0xff]
    %v1303 = vld [vmem:[#allocation8 + $0x1820] sm:$0xff]
    %v1304 = vld [vmem:[#allocation8 + $0x1828] sm:$0xff]
    %v1305 = vld [vmem:[#allocation8 + $0x1830] sm:$0xff]
    %v1306 = vld [vmem:[#allocation8 + $0x1838] sm:$0xff]
    %v1307 = vld [vmem:[#allocation8 + $0x1840] sm:$0xff]
    %v1308 = vld [vmem:[#allocation8 + $0x1848] sm:$0xff]
    %v1309 = vld [vmem:[#allocation8 + $0x1850] sm:$0xff]
    %v1310 = vld [vmem:[#allocation8 + $0x1858] sm:$0xff]
    %v1311 = vld [vmem:[#allocation8 + $0x1860] sm:$0xff]
    %v1312 = vld [vmem:[#allocation8 + $0x1868] sm:$0xff]
    %v1313 = vld [vmem:[#allocation8 + $0x1870] sm:$0xff]
    %v1314 = vld [vmem:[#allocation8 + $0x1878] sm:$0xff]
    %v1315 = vld [vmem:[#allocation8 + $0x1880] sm:$0xff]
    %v1316 = vld [vmem:[#allocation8 + $0x1888] sm:$0xff]
    %v1317 = vld [vmem:[#allocation8 + $0x1890] sm:$0xff]
    %v1318 = vld [vmem:[#allocation8 + $0x1898] sm:$0xff]
    %v1319 = vld [vmem:[#allocation8 + $0x18a0] sm:$0xff]
    %v1320 = vld [vmem:[#allocation8 + $0x18a8] sm:$0xff]
    %v1321 = vld [vmem:[#allocation8 + $0x18b0] sm:$0xff]
    %v1322 = vld [vmem:[#allocation8 + $0x18b8] sm:$0xff]
    %v1323 = vld [vmem:[#allocation8 + $0x18c0] sm:$0xff]
    %v1324 = vld [vmem:[#allocation8 + $0x18c8] sm:$0xff]
    %v1325 = vld [vmem:[#allocation8 + $0x18d0] sm:$0xff]
    %v1326 = vld [vmem:[#allocation8 + $0x18d8] sm:$0xff]
    %v1327 = vld [vmem:[#allocation8 + $0x18e0] sm:$0xff]
    %v1328 = vld [vmem:[#allocation8 + $0x18e8] sm:$0xff]
    %v1329 = vld [vmem:[#allocation8 + $0x18f0] sm:$0xff]
    %v1330 = vld [vmem:[#allocation8 + $0x18f8] sm:$0xff]
    %v1331 = vld [vmem:[#allocation8 + $0x1900] sm:$0xff]
    %v1332 = vld [vmem:[#allocation8 + $0x1908] sm:$0xff]
    %v1333 = vld [vmem:[#allocation8 + $0x1910] sm:$0xff]
    %v1334 = vld [vmem:[#allocation8 + $0x1918] sm:$0xff]
    %v1335 = vld [vmem:[#allocation8 + $0x1920] sm:$0xff]
    %v1336 = vld [vmem:[#allocation8 + $0x1928] sm:$0xff]
    %v1337 = vld [vmem:[#allocation8 + $0x1930] sm:$0xff]
    %v1338 = vld [vmem:[#allocation8 + $0x1938] sm:$0xff]
    %v1339 = vld [vmem:[#allocation8 + $0x1940] sm:$0xff]
    %v1340 = vld [vmem:[#allocation8 + $0x1948] sm:$0xff]
    %v1341 = vld [vmem:[#allocation8 + $0x1950] sm:$0xff]
    %v1342 = vld [vmem:[#allocation8 + $0x1958] sm:$0xff]
    %v1343 = vld [vmem:[#allocation8 + $0x1960] sm:$0xff]
    %v1344 = vld [vmem:[#allocation8 + $0x1968] sm:$0xff]
    %v1345 = vld [vmem:[#allocation8 + $0x1970] sm:$0xff]
    %v1346 = vld [vmem:[#allocation8 + $0x1978] sm:$0xff]
    %v1347 = vld [vmem:[#allocation8 + $0x1980] sm:$0xff]
    %v1348 = vld [vmem:[#allocation8 + $0x1988] sm:$0xff]
    %v1349 = vld [vmem:[#allocation8 + $0x1990] sm:$0xff]
    %v1350 = vld [vmem:[#allocation8 + $0x1998] sm:$0xff]
    %v1351 = vld [vmem:[#allocation8 + $0x19a0] sm:$0xff]
    %v1352 = vld [vmem:[#allocation8 + $0x19a8] sm:$0xff]
    %v1353 = vld [vmem:[#allocation8 + $0x19b0] sm:$0xff]
    %v1354 = vld [vmem:[#allocation8 + $0x19b8] sm:$0xff]
    %v1355 = vld [vmem:[#allocation8 + $0x19c0] sm:$0xff]
    %v1356 = vld [vmem:[#allocation8 + $0x19c8] sm:$0xff]
    %v1357 = vld [vmem:[#allocation8 + $0x19d0] sm:$0xff]
    %v1358 = vld [vmem:[#allocation8 + $0x19d8] sm:$0xff]
    %v1359 = vld [vmem:[#allocation8 + $0x19e0] sm:$0xff]
    %v1360 = vld [vmem:[#allocation8 + $0x19e8] sm:$0xff]
    %v1361 = vld [vmem:[#allocation8 + $0x19f0] sm:$0xff]
    %v1362 = vld [vmem:[#allocation8 + $0x19f8] sm:$0xff]
    %v1363 = vld [vmem:[#allocation8 + $0x1a00] sm:$0xff]
    %v1364 = vld [vmem:[#allocation8 + $0x1a08] sm:$0xff]
    %v1365 = vld [vmem:[#allocation8 + $0x1a10] sm:$0xff]
    %v1366 = vld [vmem:[#allocation8 + $0x1a18] sm:$0xff]
    %v1367 = vld [vmem:[#allocation8 + $0x1a20] sm:$0xff]
    %v1368 = vld [vmem:[#allocation8 + $0x1a28] sm:$0xff]
    %v1369 = vld [vmem:[#allocation8 + $0x1a30] sm:$0xff]
    %v1370 = vld [vmem:[#allocation8 + $0x1a38] sm:$0xff]
    %v1371 = vld [vmem:[#allocation8 + $0x1a40] sm:$0xff]
    %v1372 = vld [vmem:[#allocation8 + $0x1a48] sm:$0xff]
    %v1373 = vld [vmem:[#allocation8 + $0x1a50] sm:$0xff]
    %v1374 = vld [vmem:[#allocation8 + $0x1a58] sm:$0xff]
    %v1375 = vld [vmem:[#allocation8 + $0x1a60] sm:$0xff]
    %v1376 = vld [vmem:[#allocation8 + $0x1a68] sm:$0xff]
    %v1377 = vld [vmem:[#allocation8 + $0x1a70] sm:$0xff]
    %v1378 = vld [vmem:[#allocation8 + $0x1a78] sm:$0xff]
    %v1379 = vld [vmem:[#allocation8 + $0x1a80] sm:$0xff]
    %v1380 = vld [vmem:[#allocation8 + $0x1a88] sm:$0xff]
    %v1381 = vld [vmem:[#allocation8 + $0x1a90] sm:$0xff]
    %v1382 = vld [vmem:[#allocation8 + $0x1a98] sm:$0xff]
    %v1383 = vld [vmem:[#allocation8 + $0x1aa0] sm:$0xff]
    %v1384 = vld [vmem:[#allocation8 + $0x1aa8] sm:$0xff]
    %v1385 = vld [vmem:[#allocation8 + $0x1ab0] sm:$0xff]
    %v1386 = vld [vmem:[#allocation8 + $0x1ab8] sm:$0xff]
    %v1387 = vld [vmem:[#allocation8 + $0x1ac0] sm:$0xff]
    %v1388 = vld [vmem:[#allocation8 + $0x1ac8] sm:$0xff]
    %v1389 = vld [vmem:[#allocation8 + $0x1ad0] sm:$0xff]
    %v1390 = vld [vmem:[#allocation8 + $0x1ad8] sm:$0xff]
    %v1391 = vld [vmem:[#allocation8 + $0x1ae0] sm:$0xff]
    %v1392 = vld [vmem:[#allocation8 + $0x1ae8] sm:$0xff]
    %v1393 = vld [vmem:[#allocation8 + $0x1af0] sm:$0xff]
    %v1394 = vld [vmem:[#allocation8 + $0x1af8] sm:$0xff]
    %v1395 = vld [vmem:[#allocation8 + $0x1b00] sm:$0xff]
    %v1396 = vld [vmem:[#allocation8 + $0x1b08] sm:$0xff]
    %v1397 = vld [vmem:[#allocation8 + $0x1b10] sm:$0xff]
    %v1398 = vld [vmem:[#allocation8 + $0x1b18] sm:$0xff]
    %v1399 = vld [vmem:[#allocation8 + $0x1b20] sm:$0xff]
    %v1400 = vld [vmem:[#allocation8 + $0x1b28] sm:$0xff]
    %v1401 = vld [vmem:[#allocation8 + $0x1b30] sm:$0xff]
    %v1402 = vld [vmem:[#allocation8 + $0x1b38] sm:$0xff]
    %v1403 = vld [vmem:[#allocation8 + $0x1b40] sm:$0xff]
    %v1404 = vld [vmem:[#allocation8 + $0x1b48] sm:$0xff]
    %v1405 = vld [vmem:[#allocation8 + $0x1b50] sm:$0xff]
    %v1406 = vld [vmem:[#allocation8 + $0x1b58] sm:$0xff]
    %v1407 = vld [vmem:[#allocation8 + $0x1b60] sm:$0xff]
    %v1408 = vld [vmem:[#allocation8 + $0x1b68] sm:$0xff]
    %v1409 = vld [vmem:[#allocation8 + $0x1b70] sm:$0xff]
    %v1410 = vld [vmem:[#allocation8 + $0x1b78] sm:$0xff]
    %v1411 = vld [vmem:[#allocation8 + $0x1b80] sm:$0xff]
    %v1412 = vld [vmem:[#allocation8 + $0x1b88] sm:$0xff]
    %v1413 = vld [vmem:[#allocation8 + $0x1b90] sm:$0xff]
    %v1414 = vld [vmem:[#allocation8 + $0x1b98] sm:$0xff]
    %v1415 = vld [vmem:[#allocation8 + $0x1ba0] sm:$0xff]
    %v1416 = vld [vmem:[#allocation8 + $0x1ba8] sm:$0xff]
    %v1417 = vld [vmem:[#allocation8 + $0x1bb0] sm:$0xff]
    %v1418 = vld [vmem:[#allocation8 + $0x1bb8] sm:$0xff]
    %v1419 = vld [vmem:[#allocation8 + $0x1bc0] sm:$0xff]
    %v1420 = vld [vmem:[#allocation8 + $0x1bc8] sm:$0xff]
    %v1421 = vld [vmem:[#allocation8 + $0x1bd0] sm:$0xff]
    %v1422 = vld [vmem:[#allocation8 + $0x1bd8] sm:$0xff]
    %v1423 = vld [vmem:[#allocation8 + $0x1be0] sm:$0xff]
    %v1424 = vld [vmem:[#allocation8 + $0x1be8] sm:$0xff]
    %v1425 = vld [vmem:[#allocation8 + $0x1bf0] sm:$0xff]
    %v1426 = vld [vmem:[#allocation8 + $0x1bf8] sm:$0xff]
    %v1427 = vld [vmem:[#allocation8 + $0x1c00] sm:$0xff]
    %v1428 = vld [vmem:[#allocation8 + $0x1c08] sm:$0xff]
    %v1429 = vld [vmem:[#allocation8 + $0x1c10] sm:$0xff]
    %v1430 = vld [vmem:[#allocation8 + $0x1c18] sm:$0xff]
    %v1431 = vld [vmem:[#allocation8 + $0x1c20] sm:$0xff]
    %v1432 = vld [vmem:[#allocation8 + $0x1c28] sm:$0xff]
    %v1433 = vld [vmem:[#allocation8 + $0x1c30] sm:$0xff]
    %v1434 = vld [vmem:[#allocation8 + $0x1c38] sm:$0xff]
    %v1435 = vld [vmem:[#allocation8 + $0x1c40] sm:$0xff]
    %v1436 = vld [vmem:[#allocation8 + $0x1c48] sm:$0xff]
    %v1437 = vld [vmem:[#allocation8 + $0x1c50] sm:$0xff]
    %v1438 = vld [vmem:[#allocation8 + $0x1c58] sm:$0xff]
    %v1439 = vld [vmem:[#allocation8 + $0x1c60] sm:$0xff]
    %v1440 = vld [vmem:[#allocation8 + $0x1c68] sm:$0xff]
    %v1441 = vld [vmem:[#allocation8 + $0x1c70] sm:$0xff]
    %v1442 = vld [vmem:[#allocation8 + $0x1c78] sm:$0xff]
    %v1443 = vld [vmem:[#allocation8 + $0x1c80] sm:$0xff]
    %v1444 = vld [vmem:[#allocation8 + $0x1c88] sm:$0xff]
    %v1445 = vld [vmem:[#allocation8 + $0x1c90] sm:$0xff]
    %v1446 = vld [vmem:[#allocation8 + $0x1c98] sm:$0xff]
    %v1447 = vld [vmem:[#allocation8 + $0x1ca0] sm:$0xff]
    %v1448 = vld [vmem:[#allocation8 + $0x1ca8] sm:$0xff]
    %v1449 = vld [vmem:[#allocation8 + $0x1cb0] sm:$0xff]
    %v1450 = vld [vmem:[#allocation8 + $0x1cb8] sm:$0xff]
    %v1451 = vld [vmem:[#allocation8 + $0x1cc0] sm:$0xff]
    %v1452 = vld [vmem:[#allocation8 + $0x1cc8] sm:$0xff]
    %v1453 = vld [vmem:[#allocation8 + $0x1cd0] sm:$0xff]
    %v1454 = vld [vmem:[#allocation8 + $0x1cd8] sm:$0xff]
    %v1455 = vld [vmem:[#allocation8 + $0x1ce0] sm:$0xff]
    %v1456 = vld [vmem:[#allocation8 + $0x1ce8] sm:$0xff]
    %v1457 = vld [vmem:[#allocation8 + $0x1cf0] sm:$0xff]
    %v1458 = vld [vmem:[#allocation8 + $0x1cf8] sm:$0xff]
    %v1459 = vld [vmem:[#allocation8 + $0x1d00] sm:$0xff]
    %v1460 = vld [vmem:[#allocation8 + $0x1d08] sm:$0xff]
    %v1461 = vld [vmem:[#allocation8 + $0x1d10] sm:$0xff]
    %v1462 = vld [vmem:[#allocation8 + $0x1d18] sm:$0xff]
    %v1463 = vld [vmem:[#allocation8 + $0x1d20] sm:$0xff]
    %v1464 = vld [vmem:[#allocation8 + $0x1d28] sm:$0xff]
    %v1465 = vld [vmem:[#allocation8 + $0x1d30] sm:$0xff]
    %v1466 = vld [vmem:[#allocation8 + $0x1d38] sm:$0xff]
    %v1467 = vld [vmem:[#allocation8 + $0x1d40] sm:$0xff]
    %v1468 = vld [vmem:[#allocation8 + $0x1d48] sm:$0xff]
    %v1469 = vld [vmem:[#allocation8 + $0x1d50] sm:$0xff]
    %v1470 = vld [vmem:[#allocation8 + $0x1d58] sm:$0xff]
    %v1471 = vld [vmem:[#allocation8 + $0x1d60] sm:$0xff]
    %v1472 = vld [vmem:[#allocation8 + $0x1d68] sm:$0xff]
    %v1473 = vld [vmem:[#allocation8 + $0x1d70] sm:$0xff]
    %v1474 = vld [vmem:[#allocation8 + $0x1d78] sm:$0xff]
    %v1475 = vld [vmem:[#allocation8 + $0x1d80] sm:$0xff]
    %v1476 = vld [vmem:[#allocation8 + $0x1d88] sm:$0xff]
    %v1477 = vld [vmem:[#allocation8 + $0x1d90] sm:$0xff]
    %v1478 = vld [vmem:[#allocation8 + $0x1d98] sm:$0xff]
    %v1479 = vld [vmem:[#allocation8 + $0x1da0] sm:$0xff]
    %v1480 = vld [vmem:[#allocation8 + $0x1da8] sm:$0xff]
    %v1481 = vld [vmem:[#allocation8 + $0x1db0] sm:$0xff]
    %v1482 = vld [vmem:[#allocation8 + $0x1db8] sm:$0xff]
    %v1483 = vld [vmem:[#allocation8 + $0x1dc0] sm:$0xff]
    %v1484 = vld [vmem:[#allocation8 + $0x1dc8] sm:$0xff]
    %v1485 = vld [vmem:[#allocation8 + $0x1dd0] sm:$0xff]
    %v1486 = vld [vmem:[#allocation8 + $0x1dd8] sm:$0xff]
    %v1487 = vld [vmem:[#allocation8 + $0x1de0] sm:$0xff]
    %v1488 = vld [vmem:[#allocation8 + $0x1de8] sm:$0xff]
    %v1489 = vld [vmem:[#allocation8 + $0x1df0] sm:$0xff]
    %v1490 = vld [vmem:[#allocation8 + $0x1df8] sm:$0xff]
    %v1491 = vld [vmem:[#allocation8 + $0x1e00] sm:$0xff]
    %v1492 = vld [vmem:[#allocation8 + $0x1e08] sm:$0xff]
    %v1493 = vld [vmem:[#allocation8 + $0x1e10] sm:$0xff]
    %v1494 = vld [vmem:[#allocation8 + $0x1e18] sm:$0xff]
    %v1495 = vld [vmem:[#allocation8 + $0x1e20] sm:$0xff]
    %v1496 = vld [vmem:[#allocation8 + $0x1e28] sm:$0xff]
    %v1497 = vld [vmem:[#allocation8 + $0x1e30] sm:$0xff]
    %v1498 = vld [vmem:[#allocation8 + $0x1e38] sm:$0xff]
    %v1499 = vld [vmem:[#allocation8 + $0x1e40] sm:$0xff]
    %v1500 = vld [vmem:[#allocation8 + $0x1e48] sm:$0xff]
    %v1501 = vld [vmem:[#allocation8 + $0x1e50] sm:$0xff]
    %v1502 = vld [vmem:[#allocation8 + $0x1e58] sm:$0xff]
    %v1503 = vld [vmem:[#allocation8 + $0x1e60] sm:$0xff]
    %v1504 = vld [vmem:[#allocation8 + $0x1e68] sm:$0xff]
    %v1505 = vld [vmem:[#allocation8 + $0x1e70] sm:$0xff]
    %v1506 = vld [vmem:[#allocation8 + $0x1e78] sm:$0xff]
    %v1507 = vld [vmem:[#allocation8 + $0x1e80] sm:$0xff]
    %v1508 = vld [vmem:[#allocation8 + $0x1e88] sm:$0xff]
    %v1509 = vld [vmem:[#allocation8 + $0x1e90] sm:$0xff]
    %v1510 = vld [vmem:[#allocation8 + $0x1e98] sm:$0xff]
    %v1511 = vld [vmem:[#allocation8 + $0x1ea0] sm:$0xff]
    %v1512 = vld [vmem:[#allocation8 + $0x1ea8] sm:$0xff]
    %v1513 = vld [vmem:[#allocation8 + $0x1eb0] sm:$0xff]
    %v1514 = vld [vmem:[#allocation8 + $0x1eb8] sm:$0xff]
    %v1515 = vld [vmem:[#allocation8 + $0x1ec0] sm:$0xff]
    %v1516 = vld [vmem:[#allocation8 + $0x1ec8] sm:$0xff]
    %v1517 = vld [vmem:[#allocation8 + $0x1ed0] sm:$0xff]
    %v1518 = vld [vmem:[#allocation8 + $0x1ed8] sm:$0xff]
    %v1519 = vld [vmem:[#allocation8 + $0x1ee0] sm:$0xff]
    %v1520 = vld [vmem:[#allocation8 + $0x1ee8] sm:$0xff]
    %v1521 = vld [vmem:[#allocation8 + $0x1ef0] sm:$0xff]
    %v1522 = vld [vmem:[#allocation8 + $0x1ef8] sm:$0xff]
    %v1523 = vld [vmem:[#allocation8 + $0x1f00] sm:$0xff]
    %v1524 = vld [vmem:[#allocation8 + $0x1f08] sm:$0xff]
    %v1525 = vld [vmem:[#allocation8 + $0x1f10] sm:$0xff]
    %v1526 = vld [vmem:[#allocation8 + $0x1f18] sm:$0xff]
    %v1527 = vld [vmem:[#allocation8 + $0x1f20] sm:$0xff]
    %v1528 = vld [vmem:[#allocation8 + $0x1f28] sm:$0xff]
    %v1529 = vld [vmem:[#allocation8 + $0x1f30] sm:$0xff]
    %v1530 = vld [vmem:[#allocation8 + $0x1f38] sm:$0xff]
    %v1531 = vld [vmem:[#allocation8 + $0x1f40] sm:$0xff]
    %v1532 = vld [vmem:[#allocation8 + $0x1f48] sm:$0xff]
    %v1533 = vld [vmem:[#allocation8 + $0x1f50] sm:$0xff]
    %v1534 = vld [vmem:[#allocation8 + $0x1f58] sm:$0xff]
    %v1535 = vld [vmem:[#allocation8 + $0x1f60] sm:$0xff]
    %v1536 = vld [vmem:[#allocation8 + $0x1f68] sm:$0xff]
    %v1537 = vld [vmem:[#allocation8 + $0x1f70] sm:$0xff]
    %v1538 = vld [vmem:[#allocation8 + $0x1f78] sm:$0xff]
    %v1539 = vld [vmem:[#allocation8 + $0x1f80] sm:$0xff]
    %v1540 = vld [vmem:[#allocation8 + $0x1f88] sm:$0xff]
    %v1541 = vld [vmem:[#allocation8 + $0x1f90] sm:$0xff]
    %v1542 = vld [vmem:[#allocation8 + $0x1f98] sm:$0xff]
    %v1543 = vld [vmem:[#allocation8 + $0x1fa0] sm:$0xff]
    %v1544 = vld [vmem:[#allocation8 + $0x1fa8] sm:$0xff]
    %v1545 = vld [vmem:[#allocation8 + $0x1fb0] sm:$0xff]
    %v1546 = vld [vmem:[#allocation8 + $0x1fb8] sm:$0xff]
    %v1547 = vld [vmem:[#allocation8 + $0x1fc0] sm:$0xff]
    %v1548 = vld [vmem:[#allocation8 + $0x1fc8] sm:$0xff]
    %v1549 = vld [vmem:[#allocation8 + $0x1fd0] sm:$0xff]
    %v1550 = vld [vmem:[#allocation8 + $0x1fd8] sm:$0xff]
    %v1551 = vld [vmem:[#allocation8 + $0x1fe0] sm:$0xff]
    %v1552 = vld [vmem:[#allocation8 + $0x1fe8] sm:$0xff]
    %v1553 = vld [vmem:[#allocation8 + $0x1ff0] sm:$0xff]
    %v1554 = vld [vmem:[#allocation8 + $0x1ff8] sm:$0xff]
    %1555 = vmatprep.subr.mxu0 %v532
    %1556 = vmatpush1.msra.mxu0 %v531
    %1557 = vmatprep.subr.mxu0 %v534
    %1558 = vmatpush1.msra.mxu0 %v533
    %1559 = vmatprep.subr.mxu0 %v536
    %1560 = vmatpush1.msra.mxu0 %v535
    %1561 = vmatprep.subr.mxu0 %v538
    %1562 = vmatpush1.msra.mxu0 %v537
    %1563 = vmatprep.subr.mxu0 %v540
    %1564 = vmatpush1.msra.mxu0 %v539
    %1565 = vmatprep.subr.mxu0 %v542
    %1566 = vmatpush1.msra.mxu0 %v541
    %1567 = vmatprep.subr.mxu0 %v544
    %1568 = vmatpush1.msra.mxu0 %v543
    %1569 = vmatprep.subr.mxu0 %v546
    %1570 = vmatpush1.msra.mxu0 %v545
    %1571 = vmatprep.subr.mxu0 %v548
    %1572 = vmatpush1.msra.mxu0 %v547
    %1573 = vmatprep.subr.mxu0 %v550
    %1574 = vmatpush1.msra.mxu0 %v549
    %1575 = vmatprep.subr.mxu0 %v552
    %1576 = vmatpush1.msra.mxu0 %v551
    %1577 = vmatprep.subr.mxu0 %v554
    %1578 = vmatpush1.msra.mxu0 %v553
    %1579 = vmatprep.subr.mxu0 %v556
    %1580 = vmatpush1.msra.mxu0 %v555
    %1581 = vmatprep.subr.mxu0 %v558
    %1582 = vmatpush1.msra.mxu0 %v557
    %1583 = vmatprep.subr.mxu0 %v560
    %1584 = vmatpush1.msra.mxu0 %v559
    %1585 = vmatprep.subr.mxu0 %v562
    %1586 = vmatpush1.msra.mxu0 %v561
    %1587 = vmatprep.subr.mxu0 %v564
    %1588 = vmatpush1.msra.mxu0 %v563
    %1589 = vmatprep.subr.mxu0 %v566
    %1590 = vmatpush1.msra.mxu0 %v565
    %1591 = vmatprep.subr.mxu0 %v568
    %1592 = vmatpush1.msra.mxu0 %v567
    %1593 = vmatprep.subr.mxu0 %v570
    %1594 = vmatpush1.msra.mxu0 %v569
    %1595 = vmatprep.subr.mxu0 %v572
    %1596 = vmatpush1.msra.mxu0 %v571
    %1597 = vmatprep.subr.mxu0 %v574
    %1598 = vmatpush1.msra.mxu0 %v573
    %1599 = vmatprep.subr.mxu0 %v576
    %1600 = vmatpush1.msra.mxu0 %v575
    %1601 = vmatprep.subr.mxu0 %v578
    %1602 = vmatpush1.msra.mxu0 %v577
    %1603 = vmatprep.subr.mxu0 %v580
    %1604 = vmatpush1.msra.mxu0 %v579
    %1605 = vmatprep.subr.mxu0 %v582
    %1606 = vmatpush1.msra.mxu0 %v581
    %1607 = vmatprep.subr.mxu0 %v584
    %1608 = vmatpush1.msra.mxu0 %v583
    %1609 = vmatprep.subr.mxu0 %v586
    %1610 = vmatpush1.msra.mxu0 %v585
    %1611 = vmatprep.subr.mxu0 %v588
    %1612 = vmatpush1.msra.mxu0 %v587
    %1613 = vmatprep.subr.mxu0 %v590
    %1614 = vmatpush1.msra.mxu0 %v589
    %1615 = vmatprep.subr.mxu0 %v592
    %1616 = vmatpush1.msra.mxu0 %v591
    %1617 = vmatprep.subr.mxu0 %v594
    %1618 = vmatpush1.msra.mxu0 %v593
    %1619 = vmatprep.mubr.f32.mxu0 %v500
    %1620 = vmatmul.mubr.f32.gmra.mrb[0].mxu0 %v499
    %v1621 = vpop.f32.mrb[0].mxu0
    %v1622 = vadd.f32 0.0, %v1621
    %v1623 = vpop.f32.mrb[0].mxu0
    %v1624 = vadd.f32 0.0, %v1623
    %1625 = vdwg.mxu0
    %1626 = vmatprep.subr.mxu0 %v596
    %1627 = vmatpush1.msra.mxu0 %v595
    %1628 = vmatprep.subr.mxu0 %v598
    %1629 = vmatpush1.msra.mxu0 %v597
    %1630 = vmatprep.subr.mxu0 %v600
    %1631 = vmatpush1.msra.mxu0 %v599
    %1632 = vmatprep.subr.mxu0 %v602
    %1633 = vmatpush1.msra.mxu0 %v601
    %1634 = vmatprep.subr.mxu0 %v604
    %1635 = vmatpush1.msra.mxu0 %v603
    %1636 = vmatprep.subr.mxu0 %v606
    %1637 = vmatpush1.msra.mxu0 %v605
    %1638 = vmatprep.subr.mxu0 %v608
    %1639 = vmatpush1.msra.mxu0 %v607
    %1640 = vmatprep.subr.mxu0 %v610
    %1641 = vmatpush1.msra.mxu0 %v609
    %1642 = vmatprep.subr.mxu0 %v612
    %1643 = vmatpush1.msra.mxu0 %v611
    %1644 = vmatprep.subr.mxu0 %v614
    %1645 = vmatpush1.msra.mxu0 %v613
    %1646 = vmatprep.subr.mxu0 %v616
    %1647 = vmatpush1.msra.mxu0 %v615
    %1648 = vmatprep.subr.mxu0 %v618
    %1649 = vmatpush1.msra.mxu0 %v617
    %1650 = vmatprep.subr.mxu0 %v620
    %1651 = vmatpush1.msra.mxu0 %v619
    %1652 = vmatprep.subr.mxu0 %v622
    %1653 = vmatpush1.msra.mxu0 %v621
    %1654 = vmatprep.subr.mxu0 %v624
    %1655 = vmatpush1.msra.mxu0 %v623
    %1656 = vmatprep.subr.mxu0 %v626
    %1657 = vmatpush1.msra.mxu0 %v625
    %1658 = vmatprep.subr.mxu0 %v628
    %1659 = vmatpush1.msra.mxu0 %v627
    %1660 = vmatprep.subr.mxu0 %v630
    %1661 = vmatpush1.msra.mxu0 %v629
    %1662 = vmatprep.subr.mxu0 %v632
    %1663 = vmatpush1.msra.mxu0 %v631
    %1664 = vmatprep.subr.mxu0 %v634
    %1665 = vmatpush1.msra.mxu0 %v633
    %1666 = vmatprep.subr.mxu0 %v636
    %1667 = vmatpush1.msra.mxu0 %v635
    %1668 = vmatprep.subr.mxu0 %v638
    %1669 = vmatpush1.msra.mxu0 %v637
    %1670 = vmatprep.subr.mxu0 %v640
    %1671 = vmatpush1.msra.mxu0 %v639
    %1672 = vmatprep.subr.mxu0 %v642
    %1673 = vmatpush1.msra.mxu0 %v641
    %1674 = vmatprep.subr.mxu0 %v644
    %1675 = vmatpush1.msra.mxu0 %v643
    %1676 = vmatprep.subr.mxu0 %v646
    %1677 = vmatpush1.msra.mxu0 %v645
    %1678 = vmatprep.subr.mxu0 %v648
    %1679 = vmatpush1.msra.mxu0 %v647
    %1680 = vmatprep.subr.mxu0 %v650
    %1681 = vmatpush1.msra.mxu0 %v649
    %1682 = vmatprep.subr.mxu0 %v652
    %1683 = vmatpush1.msra.mxu0 %v651
    %1684 = vmatprep.subr.mxu0 %v654
    %1685 = vmatpush1.msra.mxu0 %v653
    %1686 = vmatprep.subr.mxu0 %v656
    %1687 = vmatpush1.msra.mxu0 %v655
    %1688 = vmatprep.subr.mxu0 %v658
    %1689 = vmatpush1.msra.mxu0 %v657
    %1690 = vmatprep.mubr.f32.mxu0 %v502
    %1691 = vmatmul.mubr.f32.gmra.mrb[0].mxu0 %v501
    %v1692 = vpop.f32.mrb[0].mxu0
    %v1693 = vadd.f32 %v1622, %v1692
    %v1694 = vpop.f32.mrb[0].mxu0
    %v1695 = vadd.f32 %v1624, %v1694
    %1696 = vdwg.mxu0
    %1697 = vmatprep.subr.mxu0 %v660
    %1698 = vmatpush1.msra.mxu0 %v659
    %1699 = vmatprep.subr.mxu0 %v662
    %1700 = vmatpush1.msra.mxu0 %v661
    %1701 = vmatprep.subr.mxu0 %v664
    %1702 = vmatpush1.msra.mxu0 %v663
    %1703 = vmatprep.subr.mxu0 %v666
    %1704 = vmatpush1.msra.mxu0 %v665
    %1705 = vmatprep.subr.mxu0 %v668
    %1706 = vmatpush1.msra.mxu0 %v667
    %1707 = vmatprep.subr.mxu0 %v670
    %1708 = vmatpush1.msra.mxu0 %v669
    %1709 = vmatprep.subr.mxu0 %v672
    %1710 = vmatpush1.msra.mxu0 %v671
    %1711 = vmatprep.subr.mxu0 %v674
    %1712 = vmatpush1.msra.mxu0 %v673
    %1713 = vmatprep.subr.mxu0 %v676
    %1714 = vmatpush1.msra.mxu0 %v675
    %1715 = vmatprep.subr.mxu0 %v678
    %1716 = vmatpush1.msra.mxu0 %v677
    %1717 = vmatprep.subr.mxu0 %v680
    %1718 = vmatpush1.msra.mxu0 %v679
    %1719 = vmatprep.subr.mxu0 %v682
    %1720 = vmatpush1.msra.mxu0 %v681
    %1721 = vmatprep.subr.mxu0 %v684
    %1722 = vmatpush1.msra.mxu0 %v683
    %1723 = vmatprep.subr.mxu0 %v686
    %1724 = vmatpush1.msra.mxu0 %v685
    %1725 = vmatprep.subr.mxu0 %v688
    %1726 = vmatpush1.msra.mxu0 %v687
    %1727 = vmatprep.subr.mxu0 %v690
    %1728 = vmatpush1.msra.mxu0 %v689
    %1729 = vmatprep.subr.mxu0 %v692
    %1730 = vmatpush1.msra.mxu0 %v691
    %1731 = vmatprep.subr.mxu0 %v694
    %1732 = vmatpush1.msra.mxu0 %v693
    %1733 = vmatprep.subr.mxu0 %v696
    %1734 = vmatpush1.msra.mxu0 %v695
    %1735 = vmatprep.subr.mxu0 %v698
    %1736 = vmatpush1.msra.mxu0 %v697
    %1737 = vmatprep.subr.mxu0 %v700
    %1738 = vmatpush1.msra.mxu0 %v699
    %1739 = vmatprep.subr.mxu0 %v702
    %1740 = vmatpush1.msra.mxu0 %v701
    %1741 = vmatprep.subr.mxu0 %v704
    %1742 = vmatpush1.msra.mxu0 %v703
    %1743 = vmatprep.subr.mxu0 %v706
    %1744 = vmatpush1.msra.mxu0 %v705
    %1745 = vmatprep.subr.mxu0 %v708
    %1746 = vmatpush1.msra.mxu0 %v707
    %1747 = vmatprep.subr.mxu0 %v710
    %1748 = vmatpush1.msra.mxu0 %v709
    %1749 = vmatprep.subr.mxu0 %v712
    %1750 = vmatpush1.msra.mxu0 %v711
    %1751 = vmatprep.subr.mxu0 %v714
    %1752 = vmatpush1.msra.mxu0 %v713
    %1753 = vmatprep.subr.mxu0 %v716
    %1754 = vmatpush1.msra.mxu0 %v715
    %1755 = vmatprep.subr.mxu0 %v718
    %1756 = vmatpush1.msra.mxu0 %v717
    %1757 = vmatprep.subr.mxu0 %v720
    %1758 = vmatpush1.msra.mxu0 %v719
    %1759 = vmatprep.subr.mxu0 %v722
    %1760 = vmatpush1.msra.mxu0 %v721
    %1761 = vmatprep.mubr.f32.mxu0 %v504
    %1762 = vmatmul.mubr.f32.gmra.mrb[0].mxu0 %v503
    %v1763 = vpop.f32.mrb[0].mxu0
    %v1764 = vadd.f32 %v1693, %v1763
    %v1765 = vpop.f32.mrb[0].mxu0
    %v1766 = vadd.f32 %v1695, %v1765
    %1767 = vdwg.mxu0
    %1768 = vmatprep.subr.mxu0 %v724
    %1769 = vmatpush1.msra.mxu0 %v723
    %1770 = vmatprep.subr.mxu0 %v726
    %1771 = vmatpush1.msra.mxu0 %v725
    %1772 = vmatprep.subr.mxu0 %v728
    %1773 = vmatpush1.msra.mxu0 %v727
    %1774 = vmatprep.subr.mxu0 %v730
    %1775 = vmatpush1.msra.mxu0 %v729
    %1776 = vmatprep.subr.mxu0 %v732
    %1777 = vmatpush1.msra.mxu0 %v731
    %1778 = vmatprep.subr.mxu0 %v734
    %1779 = vmatpush1.msra.mxu0 %v733
    %1780 = vmatprep.subr.mxu0 %v736
    %1781 = vmatpush1.msra.mxu0 %v735
    %1782 = vmatprep.subr.mxu0 %v738
    %1783 = vmatpush1.msra.mxu0 %v737
    %1784 = vmatprep.subr.mxu0 %v740
    %1785 = vmatpush1.msra.mxu0 %v739
    %1786 = vmatprep.subr.mxu0 %v742
    %1787 = vmatpush1.msra.mxu0 %v741
    %1788 = vmatprep.subr.mxu0 %v744
    %1789 = vmatpush1.msra.mxu0 %v743
    %1790 = vmatprep.subr.mxu0 %v746
    %1791 = vmatpush1.msra.mxu0 %v745
    %1792 = vmatprep.subr.mxu0 %v748
    %1793 = vmatpush1.msra.mxu0 %v747
    %1794 = vmatprep.subr.mxu0 %v750
    %1795 = vmatpush1.msra.mxu0 %v749
    %1796 = vmatprep.subr.mxu0 %v752
    %1797 = vmatpush1.msra.mxu0 %v751
    %1798 = vmatprep.subr.mxu0 %v754
    %1799 = vmatpush1.msra.mxu0 %v753
    %1800 = vmatprep.subr.mxu0 %v756
    %1801 = vmatpush1.msra.mxu0 %v755
    %1802 = vmatprep.subr.mxu0 %v758
    %1803 = vmatpush1.msra.mxu0 %v757
    %1804 = vmatprep.subr.mxu0 %v760
    %1805 = vmatpush1.msra.mxu0 %v759
    %1806 = vmatprep.subr.mxu0 %v762
    %1807 = vmatpush1.msra.mxu0 %v761
    %1808 = vmatprep.subr.mxu0 %v764
    %1809 = vmatpush1.msra.mxu0 %v763
    %1810 = vmatprep.subr.mxu0 %v766
    %1811 = vmatpush1.msra.mxu0 %v765
    %1812 = vmatprep.subr.mxu0 %v768
    %1813 = vmatpush1.msra.mxu0 %v767
    %1814 = vmatprep.subr.mxu0 %v770
    %1815 = vmatpush1.msra.mxu0 %v769
    %1816 = vmatprep.subr.mxu0 %v772
    %1817 = vmatpush1.msra.mxu0 %v771
    %1818 = vmatprep.subr.mxu0 %v774
    %1819 = vmatpush1.msra.mxu0 %v773
    %1820 = vmatprep.subr.mxu0 %v776
    %1821 = vmatpush1.msra.mxu0 %v775
    %1822 = vmatprep.subr.mxu0 %v778
    %1823 = vmatpush1.msra.mxu0 %v777
    %1824 = vmatprep.subr.mxu0 %v780
    %1825 = vmatpush1.msra.mxu0 %v779
    %1826 = vmatprep.subr.mxu0 %v782
    %1827 = vmatpush1.msra.mxu0 %v781
    %1828 = vmatprep.subr.mxu0 %v784
    %1829 = vmatpush1.msra.mxu0 %v783
    %1830 = vmatprep.subr.mxu0 %v786
    %1831 = vmatpush1.msra.mxu0 %v785
    %1832 = vmatprep.mubr.f32.mxu0 %v506
    %1833 = vmatmul.mubr.f32.gmra.mrb[0].mxu0 %v505
    %v1834 = vpop.f32.mrb[0].mxu0
    %v1835 = vadd.f32 %v1764, %v1834
    %v1836 = vpop.f32.mrb[0].mxu0
    %v1837 = vadd.f32 %v1766, %v1836
    %1838 = vdwg.mxu0
    %1839 = vmatprep.subr.mxu0 %v788
    %1840 = vmatpush1.msra.mxu0 %v787
    %1841 = vmatprep.subr.mxu0 %v790
    %1842 = vmatpush1.msra.mxu0 %v789
    %1843 = vmatprep.subr.mxu0 %v792
    %1844 = vmatpush1.msra.mxu0 %v791
    %1845 = vmatprep.subr.mxu0 %v794
    %1846 = vmatpush1.msra.mxu0 %v793
    %1847 = vmatprep.subr.mxu0 %v796
    %1848 = vmatpush1.msra.mxu0 %v795
    %1849 = vmatprep.subr.mxu0 %v798
    %1850 = vmatpush1.msra.mxu0 %v797
    %1851 = vmatprep.subr.mxu0 %v800
    %1852 = vmatpush1.msra.mxu0 %v799
    %1853 = vmatprep.subr.mxu0 %v802
    %1854 = vmatpush1.msra.mxu0 %v801
    %1855 = vmatprep.subr.mxu0 %v804
    %1856 = vmatpush1.msra.mxu0 %v803
    %1857 = vmatprep.subr.mxu0 %v806
    %1858 = vmatpush1.msra.mxu0 %v805
    %1859 = vmatprep.subr.mxu0 %v808
    %1860 = vmatpush1.msra.mxu0 %v807
    %1861 = vmatprep.subr.mxu0 %v810
    %1862 = vmatpush1.msra.mxu0 %v809
    %1863 = vmatprep.subr.mxu0 %v812
    %1864 = vmatpush1.msra.mxu0 %v811
    %1865 = vmatprep.subr.mxu0 %v814
    %1866 = vmatpush1.msra.mxu0 %v813
    %1867 = vmatprep.subr.mxu0 %v816
    %1868 = vmatpush1.msra.mxu0 %v815
    %1869 = vmatprep.subr.mxu0 %v818
    %1870 = vmatpush1.msra.mxu0 %v817
    %1871 = vmatprep.subr.mxu0 %v820
    %1872 = vmatpush1.msra.mxu0 %v819
    %1873 = vmatprep.subr.mxu0 %v822
    %1874 = vmatpush1.msra.mxu0 %v821
    %1875 = vmatprep.subr.mxu0 %v824
    %1876 = vmatpush1.msra.mxu0 %v823
    %1877 = vmatprep.subr.mxu0 %v826
    %1878 = vmatpush1.msra.mxu0 %v825
    %1879 = vmatprep.subr.mxu0 %v828
    %1880 = vmatpush1.msra.mxu0 %v827
    %1881 = vmatprep.subr.mxu0 %v830
    %1882 = vmatpush1.msra.mxu0 %v829
    %1883 = vmatprep.subr.mxu0 %v832
    %1884 = vmatpush1.msra.mxu0 %v831
    %1885 = vmatprep.subr.mxu0 %v834
    %1886 = vmatpush1.msra.mxu0 %v833
    %1887 = vmatprep.subr.mxu0 %v836
    %1888 = vmatpush1.msra.mxu0 %v835
    %1889 = vmatprep.subr.mxu0 %v838
    %1890 = vmatpush1.msra.mxu0 %v837
    %1891 = vmatprep.subr.mxu0 %v840
    %1892 = vmatpush1.msra.mxu0 %v839
    %1893 = vmatprep.subr.mxu0 %v842
    %1894 = vmatpush1.msra.mxu0 %v841
    %1895 = vmatprep.subr.mxu0 %v844
    %1896 = vmatpush1.msra.mxu0 %v843
    %1897 = vmatprep.subr.mxu0 %v846
    %1898 = vmatpush1.msra.mxu0 %v845
    %1899 = vmatprep.subr.mxu0 %v848
    %1900 = vmatpush1.msra.mxu0 %v847
    %1901 = vmatprep.subr.mxu0 %v850
    %1902 = vmatpush1.msra.mxu0 %v849
    %1903 = vmatprep.mubr.f32.mxu0 %v508
    %1904 = vmatmul.mubr.f32.gmra.mrb[0].mxu0 %v507
    %v1905 = vpop.f32.mrb[0].mxu0
    %v1906 = vadd.f32 %v1835, %v1905
    %v1907 = vpop.f32.mrb[0].mxu0
    %v1908 = vadd.f32 %v1837, %v1907
    %1909 = vdwg.mxu0
    %1910 = vmatprep.subr.mxu0 %v852
    %1911 = vmatpush1.msra.mxu0 %v851
    %1912 = vmatprep.subr.mxu0 %v854
    %1913 = vmatpush1.msra.mxu0 %v853
    %1914 = vmatprep.subr.mxu0 %v856
    %1915 = vmatpush1.msra.mxu0 %v855
    %1916 = vmatprep.subr.mxu0 %v858
    %1917 = vmatpush1.msra.mxu0 %v857
    %1918 = vmatprep.subr.mxu0 %v860
    %1919 = vmatpush1.msra.mxu0 %v859
    %1920 = vmatprep.subr.mxu0 %v862
    %1921 = vmatpush1.msra.mxu0 %v861
    %1922 = vmatprep.subr.mxu0 %v864
    %1923 = vmatpush1.msra.mxu0 %v863
    %1924 = vmatprep.subr.mxu0 %v866
    %1925 = vmatpush1.msra.mxu0 %v865
    %1926 = vmatprep.subr.mxu0 %v868
    %1927 = vmatpush1.msra.mxu0 %v867
    %1928 = vmatprep.subr.mxu0 %v870
    %1929 = vmatpush1.msra.mxu0 %v869
    %1930 = vmatprep.subr.mxu0 %v872
    %1931 = vmatpush1.msra.mxu0 %v871
    %1932 = vmatprep.subr.mxu0 %v874
    %1933 = vmatpush1.msra.mxu0 %v873
    %1934 = vmatprep.subr.mxu0 %v876
    %1935 = vmatpush1.msra.mxu0 %v875
    %1936 = vmatprep.subr.mxu0 %v878
    %1937 = vmatpush1.msra.mxu0 %v877
    %1938 = vmatprep.subr.mxu0 %v880
    %1939 = vmatpush1.msra.mxu0 %v879
    %1940 = vmatprep.subr.mxu0 %v882
    %1941 = vmatpush1.msra.mxu0 %v881
    %1942 = vmatprep.subr.mxu0 %v884
    %1943 = vmatpush1.msra.mxu0 %v883
    %1944 = vmatprep.subr.mxu0 %v886
    %1945 = vmatpush1.msra.mxu0 %v885
    %1946 = vmatprep.subr.mxu0 %v888
    %1947 = vmatpush1.msra.mxu0 %v887
    %1948 = vmatprep.subr.mxu0 %v890
    %1949 = vmatpush1.msra.mxu0 %v889
    %1950 = vmatprep.subr.mxu0 %v892
    %1951 = vmatpush1.msra.mxu0 %v891
    %1952 = vmatprep.subr.mxu0 %v894
    %1953 = vmatpush1.msra.mxu0 %v893
    %1954 = vmatprep.subr.mxu0 %v896
    %1955 = vmatpush1.msra.mxu0 %v895
    %1956 = vmatprep.subr.mxu0 %v898
    %1957 = vmatpush1.msra.mxu0 %v897
    %1958 = vmatprep.subr.mxu0 %v900
    %1959 = vmatpush1.msra.mxu0 %v899
    %1960 = vmatprep.subr.mxu0 %v902
    %1961 = vmatpush1.msra.mxu0 %v901
    %1962 = vmatprep.subr.mxu0 %v904
    %1963 = vmatpush1.msra.mxu0 %v903
    %1964 = vmatprep.subr.mxu0 %v906
    %1965 = vmatpush1.msra.mxu0 %v905
    %1966 = vmatprep.subr.mxu0 %v908
    %1967 = vmatpush1.msra.mxu0 %v907
    %1968 = vmatprep.subr.mxu0 %v910
    %1969 = vmatpush1.msra.mxu0 %v909
    %1970 = vmatprep.subr.mxu0 %v912
    %1971 = vmatpush1.msra.mxu0 %v911
    %1972 = vmatprep.subr.mxu0 %v914
    %1973 = vmatpush1.msra.mxu0 %v913
    %1974 = vmatprep.mubr.f32.mxu0 %v510
    %1975 = vmatmul.mubr.f32.gmra.mrb[0].mxu0 %v509
    %v1976 = vpop.f32.mrb[0].mxu0
    %v1977 = vadd.f32 %v1906, %v1976
    %v1978 = vpop.f32.mrb[0].mxu0
    %v1979 = vadd.f32 %v1908, %v1978
    %1980 = vdwg.mxu0
    %1981 = vmatprep.subr.mxu0 %v916
    %1982 = vmatpush1.msra.mxu0 %v915
    %1983 = vmatprep.subr.mxu0 %v918
    %1984 = vmatpush1.msra.mxu0 %v917
    %1985 = vmatprep.subr.mxu0 %v920
    %1986 = vmatpush1.msra.mxu0 %v919
    %1987 = vmatprep.subr.mxu0 %v922
    %1988 = vmatpush1.msra.mxu0 %v921
    %1989 = vmatprep.subr.mxu0 %v924
    %1990 = vmatpush1.msra.mxu0 %v923
    %1991 = vmatprep.subr.mxu0 %v926
    %1992 = vmatpush1.msra.mxu0 %v925
    %1993 = vmatprep.subr.mxu0 %v928
    %1994 = vmatpush1.msra.mxu0 %v927
    %1995 = vmatprep.subr.mxu0 %v930
    %1996 = vmatpush1.msra.mxu0 %v929
    %1997 = vmatprep.subr.mxu0 %v932
    %1998 = vmatpush1.msra.mxu0 %v931
    %1999 = vmatprep.subr.mxu0 %v934
    %2000 = vmatpush1.msra.mxu0 %v933
    %2001 = vmatprep.subr.mxu0 %v936
    %2002 = vmatpush1.msra.mxu0 %v935
    %2003 = vmatprep.subr.mxu0 %v938
    %2004 = vmatpush1.msra.mxu0 %v937
    %2005 = vmatprep.subr.mxu0 %v940
    %2006 = vmatpush1.msra.mxu0 %v939
    %2007 = vmatprep.subr.mxu0 %v942
    %2008 = vmatpush1.msra.mxu0 %v941
    %2009 = vmatprep.subr.mxu0 %v944
    %2010 = vmatpush1.msra.mxu0 %v943
    %2011 = vmatprep.subr.mxu0 %v946
    %2012 = vmatpush1.msra.mxu0 %v945
    %2013 = vmatprep.subr.mxu0 %v948
    %2014 = vmatpush1.msra.mxu0 %v947
    %2015 = vmatprep.subr.mxu0 %v950
    %2016 = vmatpush1.msra.mxu0 %v949
    %2017 = vmatprep.subr.mxu0 %v952
    %2018 = vmatpush1.msra.mxu0 %v951
    %2019 = vmatprep.subr.mxu0 %v954
    %2020 = vmatpush1.msra.mxu0 %v953
    %2021 = vmatprep.subr.mxu0 %v956
    %2022 = vmatpush1.msra.mxu0 %v955
    %2023 = vmatprep.subr.mxu0 %v958
    %2024 = vmatpush1.msra.mxu0 %v957
    %2025 = vmatprep.subr.mxu0 %v960
    %2026 = vmatpush1.msra.mxu0 %v959
    %2027 = vmatprep.subr.mxu0 %v962
    %2028 = vmatpush1.msra.mxu0 %v961
    %2029 = vmatprep.subr.mxu0 %v964
    %2030 = vmatpush1.msra.mxu0 %v963
    %2031 = vmatprep.subr.mxu0 %v966
    %2032 = vmatpush1.msra.mxu0 %v965
    %2033 = vmatprep.subr.mxu0 %v968
    %2034 = vmatpush1.msra.mxu0 %v967
    %2035 = vmatprep.subr.mxu0 %v970
    %2036 = vmatpush1.msra.mxu0 %v969
    %2037 = vmatprep.subr.mxu0 %v972
    %2038 = vmatpush1.msra.mxu0 %v971
    %2039 = vmatprep.subr.mxu0 %v974
    %2040 = vmatpush1.msra.mxu0 %v973
    %2041 = vmatprep.subr.mxu0 %v976
    %2042 = vmatpush1.msra.mxu0 %v975
    %2043 = vmatprep.subr.mxu0 %v978
    %2044 = vmatpush1.msra.mxu0 %v977
    %2045 = vmatprep.mubr.f32.mxu0 %v512
    %2046 = vmatmul.mubr.f32.gmra.mrb[0].mxu0 %v511
    %v2047 = vpop.f32.mrb[0].mxu0
    %v2048 = vadd.f32 %v1977, %v2047
    %v2049 = vpop.f32.mrb[0].mxu0
    %v2050 = vadd.f32 %v1979, %v2049
    %2051 = vdwg.mxu0
    %2052 = vmatprep.subr.mxu0 %v980
    %2053 = vmatpush1.msra.mxu0 %v979
    %2054 = vmatprep.subr.mxu0 %v982
    %2055 = vmatpush1.msra.mxu0 %v981
    %2056 = vmatprep.subr.mxu0 %v984
    %2057 = vmatpush1.msra.mxu0 %v983
    %2058 = vmatprep.subr.mxu0 %v986
    %2059 = vmatpush1.msra.mxu0 %v985
    %2060 = vmatprep.subr.mxu0 %v988
    %2061 = vmatpush1.msra.mxu0 %v987
    %2062 = vmatprep.subr.mxu0 %v990
    %2063 = vmatpush1.msra.mxu0 %v989
    %2064 = vmatprep.subr.mxu0 %v992
    %2065 = vmatpush1.msra.mxu0 %v991
    %2066 = vmatprep.subr.mxu0 %v994
    %2067 = vmatpush1.msra.mxu0 %v993
    %2068 = vmatprep.subr.mxu0 %v996
    %2069 = vmatpush1.msra.mxu0 %v995
    %2070 = vmatprep.subr.mxu0 %v998
    %2071 = vmatpush1.msra.mxu0 %v997
    %2072 = vmatprep.subr.mxu0 %v1000
    %2073 = vmatpush1.msra.mxu0 %v999
    %2074 = vmatprep.subr.mxu0 %v1002
    %2075 = vmatpush1.msra.mxu0 %v1001
    %2076 = vmatprep.subr.mxu0 %v1004
    %2077 = vmatpush1.msra.mxu0 %v1003
    %2078 = vmatprep.subr.mxu0 %v1006
    %2079 = vmatpush1.msra.mxu0 %v1005
    %2080 = vmatprep.subr.mxu0 %v1008
    %2081 = vmatpush1.msra.mxu0 %v1007
    %2082 = vmatprep.subr.mxu0 %v1010
    %2083 = vmatpush1.msra.mxu0 %v1009
    %2084 = vmatprep.subr.mxu0 %v1012
    %2085 = vmatpush1.msra.mxu0 %v1011
    %2086 = vmatprep.subr.mxu0 %v1014
    %2087 = vmatpush1.msra.mxu0 %v1013
    %2088 = vmatprep.subr.mxu0 %v1016
    %2089 = vmatpush1.msra.mxu0 %v1015
    %2090 = vmatprep.subr.mxu0 %v1018
    %2091 = vmatpush1.msra.mxu0 %v1017
    %2092 = vmatprep.subr.mxu0 %v1020
    %2093 = vmatpush1.msra.mxu0 %v1019
    %2094 = vmatprep.subr.mxu0 %v1022
    %2095 = vmatpush1.msra.mxu0 %v1021
    %2096 = vmatprep.subr.mxu0 %v1024
    %2097 = vmatpush1.msra.mxu0 %v1023
    %2098 = vmatprep.subr.mxu0 %v1026
    %2099 = vmatpush1.msra.mxu0 %v1025
    %2100 = vmatprep.subr.mxu0 %v1028
    %2101 = vmatpush1.msra.mxu0 %v1027
    %2102 = vmatprep.subr.mxu0 %v1030
    %2103 = vmatpush1.msra.mxu0 %v1029
    %2104 = vmatprep.subr.mxu0 %v1032
    %2105 = vmatpush1.msra.mxu0 %v1031
    %2106 = vmatprep.subr.mxu0 %v1034
    %2107 = vmatpush1.msra.mxu0 %v1033
    %2108 = vmatprep.subr.mxu0 %v1036
    %2109 = vmatpush1.msra.mxu0 %v1035
    %2110 = vmatprep.subr.mxu0 %v1038
    %2111 = vmatpush1.msra.mxu0 %v1037
    %2112 = vmatprep.subr.mxu0 %v1040
    %2113 = vmatpush1.msra.mxu0 %v1039
    %2114 = vmatprep.subr.mxu0 %v1042
    %2115 = vmatpush1.msra.mxu0 %v1041
    %2116 = vmatprep.mubr.f32.mxu0 %v514
    %2117 = vmatmul.mubr.f32.gmra.mrb[0].mxu0 %v513
    %v2118 = vpop.f32.mrb[0].mxu0
    %v2119 = vadd.f32 %v2048, %v2118
    %v2120 = vpop.f32.mrb[0].mxu0
    %v2121 = vadd.f32 %v2050, %v2120
    %2122 = vdwg.mxu0
    %2123 = vmatprep.subr.mxu0 %v1044
    %2124 = vmatpush1.msra.mxu0 %v1043
    %2125 = vmatprep.subr.mxu0 %v1046
    %2126 = vmatpush1.msra.mxu0 %v1045
    %2127 = vmatprep.subr.mxu0 %v1048
    %2128 = vmatpush1.msra.mxu0 %v1047
    %2129 = vmatprep.subr.mxu0 %v1050
    %2130 = vmatpush1.msra.mxu0 %v1049
    %2131 = vmatprep.subr.mxu0 %v1052
    %2132 = vmatpush1.msra.mxu0 %v1051
    %2133 = vmatprep.subr.mxu0 %v1054
    %2134 = vmatpush1.msra.mxu0 %v1053
    %2135 = vmatprep.subr.mxu0 %v1056
    %2136 = vmatpush1.msra.mxu0 %v1055
    %2137 = vmatprep.subr.mxu0 %v1058
    %2138 = vmatpush1.msra.mxu0 %v1057
    %2139 = vmatprep.subr.mxu0 %v1060
    %2140 = vmatpush1.msra.mxu0 %v1059
    %2141 = vmatprep.subr.mxu0 %v1062
    %2142 = vmatpush1.msra.mxu0 %v1061
    %2143 = vmatprep.subr.mxu0 %v1064
    %2144 = vmatpush1.msra.mxu0 %v1063
    %2145 = vmatprep.subr.mxu0 %v1066
    %2146 = vmatpush1.msra.mxu0 %v1065
    %2147 = vmatprep.subr.mxu0 %v1068
    %2148 = vmatpush1.msra.mxu0 %v1067
    %2149 = vmatprep.subr.mxu0 %v1070
    %2150 = vmatpush1.msra.mxu0 %v1069
    %2151 = vmatprep.subr.mxu0 %v1072
    %2152 = vmatpush1.msra.mxu0 %v1071
    %2153 = vmatprep.subr.mxu0 %v1074
    %2154 = vmatpush1.msra.mxu0 %v1073
    %2155 = vmatprep.subr.mxu0 %v1076
    %2156 = vmatpush1.msra.mxu0 %v1075
    %2157 = vmatprep.subr.mxu0 %v1078
    %2158 = vmatpush1.msra.mxu0 %v1077
    %2159 = vmatprep.subr.mxu0 %v1080
    %2160 = vmatpush1.msra.mxu0 %v1079
    %2161 = vmatprep.subr.mxu0 %v1082
    %2162 = vmatpush1.msra.mxu0 %v1081
    %2163 = vmatprep.subr.mxu0 %v1084
    %2164 = vmatpush1.msra.mxu0 %v1083
    %2165 = vmatprep.subr.mxu0 %v1086
    %2166 = vmatpush1.msra.mxu0 %v1085
    %2167 = vmatprep.subr.mxu0 %v1088
    %2168 = vmatpush1.msra.mxu0 %v1087
    %2169 = vmatprep.subr.mxu0 %v1090
    %2170 = vmatpush1.msra.mxu0 %v1089
    %2171 = vmatprep.subr.mxu0 %v1092
    %2172 = vmatpush1.msra.mxu0 %v1091
    %2173 = vmatprep.subr.mxu0 %v1094
    %2174 = vmatpush1.msra.mxu0 %v1093
    %2175 = vmatprep.subr.mxu0 %v1096
    %2176 = vmatpush1.msra.mxu0 %v1095
    %2177 = vmatprep.subr.mxu0 %v1098
    %2178 = vmatpush1.msra.mxu0 %v1097
    %2179 = vmatprep.subr.mxu0 %v1100
    %2180 = vmatpush1.msra.mxu0 %v1099
    %2181 = vmatprep.subr.mxu0 %v1102
    %2182 = vmatpush1.msra.mxu0 %v1101
    %2183 = vmatprep.subr.mxu0 %v1104
    %2184 = vmatpush1.msra.mxu0 %v1103
    %2185 = vmatprep.subr.mxu0 %v1106
    %2186 = vmatpush1.msra.mxu0 %v1105
    %2187 = vmatprep.mubr.f32.mxu0 %v516
    %2188 = vmatmul.mubr.f32.gmra.mrb[0].mxu0 %v515
    %v2189 = vpop.f32.mrb[0].mxu0
    %v2190 = vadd.f32 %v2119, %v2189
    %v2191 = vpop.f32.mrb[0].mxu0
    %v2192 = vadd.f32 %v2121, %v2191
    %2193 = vdwg.mxu0
    %2194 = vmatprep.subr.mxu0 %v1108
    %2195 = vmatpush1.msra.mxu0 %v1107
    %2196 = vmatprep.subr.mxu0 %v1110
    %2197 = vmatpush1.msra.mxu0 %v1109
    %2198 = vmatprep.subr.mxu0 %v1112
    %2199 = vmatpush1.msra.mxu0 %v1111
    %2200 = vmatprep.subr.mxu0 %v1114
    %2201 = vmatpush1.msra.mxu0 %v1113
    %2202 = vmatprep.subr.mxu0 %v1116
    %2203 = vmatpush1.msra.mxu0 %v1115
    %2204 = vmatprep.subr.mxu0 %v1118
    %2205 = vmatpush1.msra.mxu0 %v1117
    %2206 = vmatprep.subr.mxu0 %v1120
    %2207 = vmatpush1.msra.mxu0 %v1119
    %2208 = vmatprep.subr.mxu0 %v1122
    %2209 = vmatpush1.msra.mxu0 %v1121
    %2210 = vmatprep.subr.mxu0 %v1124
    %2211 = vmatpush1.msra.mxu0 %v1123
    %2212 = vmatprep.subr.mxu0 %v1126
    %2213 = vmatpush1.msra.mxu0 %v1125
    %2214 = vmatprep.subr.mxu0 %v1128
    %2215 = vmatpush1.msra.mxu0 %v1127
    %2216 = vmatprep.subr.mxu0 %v1130
    %2217 = vmatpush1.msra.mxu0 %v1129
    %2218 = vmatprep.subr.mxu0 %v1132
    %2219 = vmatpush1.msra.mxu0 %v1131
    %2220 = vmatprep.subr.mxu0 %v1134
    %2221 = vmatpush1.msra.mxu0 %v1133
    %2222 = vmatprep.subr.mxu0 %v1136
    %2223 = vmatpush1.msra.mxu0 %v1135
    %2224 = vmatprep.subr.mxu0 %v1138
    %2225 = vmatpush1.msra.mxu0 %v1137
    %2226 = vmatprep.subr.mxu0 %v1140
    %2227 = vmatpush1.msra.mxu0 %v1139
    %2228 = vmatprep.subr.mxu0 %v1142
    %2229 = vmatpush1.msra.mxu0 %v1141
    %2230 = vmatprep.subr.mxu0 %v1144
    %2231 = vmatpush1.msra.mxu0 %v1143
    %2232 = vmatprep.subr.mxu0 %v1146
    %2233 = vmatpush1.msra.mxu0 %v1145
    %2234 = vmatprep.subr.mxu0 %v1148
    %2235 = vmatpush1.msra.mxu0 %v1147
    %2236 = vmatprep.subr.mxu0 %v1150
    %2237 = vmatpush1.msra.mxu0 %v1149
    %2238 = vmatprep.subr.mxu0 %v1152
    %2239 = vmatpush1.msra.mxu0 %v1151
    %2240 = vmatprep.subr.mxu0 %v1154
    %2241 = vmatpush1.msra.mxu0 %v1153
    %2242 = vmatprep.subr.mxu0 %v1156
    %2243 = vmatpush1.msra.mxu0 %v1155
    %2244 = vmatprep.subr.mxu0 %v1158
    %2245 = vmatpush1.msra.mxu0 %v1157
    %2246 = vmatprep.subr.mxu0 %v1160
    %2247 = vmatpush1.msra.mxu0 %v1159
    %2248 = vmatprep.subr.mxu0 %v1162
    %2249 = vmatpush1.msra.mxu0 %v1161
    %2250 = vmatprep.subr.mxu0 %v1164
    %2251 = vmatpush1.msra.mxu0 %v1163
    %2252 = vmatprep.subr.mxu0 %v1166
    %2253 = vmatpush1.msra.mxu0 %v1165
    %2254 = vmatprep.subr.mxu0 %v1168
    %2255 = vmatpush1.msra.mxu0 %v1167
    %2256 = vmatprep.subr.mxu0 %v1170
    %2257 = vmatpush1.msra.mxu0 %v1169
    %2258 = vmatprep.mubr.f32.mxu0 %v518
    %2259 = vmatmul.mubr.f32.gmra.mrb[0].mxu0 %v517
    %v2260 = vpop.f32.mrb[0].mxu0
    %v2261 = vadd.f32 %v2190, %v2260
    %v2262 = vpop.f32.mrb[0].mxu0
    %v2263 = vadd.f32 %v2192, %v2262
    %2264 = vdwg.mxu0
    %2265 = vmatprep.subr.mxu0 %v1172
    %2266 = vmatpush1.msra.mxu0 %v1171
    %2267 = vmatprep.subr.mxu0 %v1174
    %2268 = vmatpush1.msra.mxu0 %v1173
    %2269 = vmatprep.subr.mxu0 %v1176
    %2270 = vmatpush1.msra.mxu0 %v1175
    %2271 = vmatprep.subr.mxu0 %v1178
    %2272 = vmatpush1.msra.mxu0 %v1177
    %2273 = vmatprep.subr.mxu0 %v1180
    %2274 = vmatpush1.msra.mxu0 %v1179
    %2275 = vmatprep.subr.mxu0 %v1182
    %2276 = vmatpush1.msra.mxu0 %v1181
    %2277 = vmatprep.subr.mxu0 %v1184
    %2278 = vmatpush1.msra.mxu0 %v1183
    %2279 = vmatprep.subr.mxu0 %v1186
    %2280 = vmatpush1.msra.mxu0 %v1185
    %2281 = vmatprep.subr.mxu0 %v1188
    %2282 = vmatpush1.msra.mxu0 %v1187
    %2283 = vmatprep.subr.mxu0 %v1190
    %2284 = vmatpush1.msra.mxu0 %v1189
    %2285 = vmatprep.subr.mxu0 %v1192
    %2286 = vmatpush1.msra.mxu0 %v1191
    %2287 = vmatprep.subr.mxu0 %v1194
    %2288 = vmatpush1.msra.mxu0 %v1193
    %2289 = vmatprep.subr.mxu0 %v1196
    %2290 = vmatpush1.msra.mxu0 %v1195
    %2291 = vmatprep.subr.mxu0 %v1198
    %2292 = vmatpush1.msra.mxu0 %v1197
    %2293 = vmatprep.subr.mxu0 %v1200
    %2294 = vmatpush1.msra.mxu0 %v1199
    %2295 = vmatprep.subr.mxu0 %v1202
    %2296 = vmatpush1.msra.mxu0 %v1201
    %2297 = vmatprep.subr.mxu0 %v1204
    %2298 = vmatpush1.msra.mxu0 %v1203
    %2299 = vmatprep.subr.mxu0 %v1206
    %2300 = vmatpush1.msra.mxu0 %v1205
    %2301 = vmatprep.subr.mxu0 %v1208
    %2302 = vmatpush1.msra.mxu0 %v1207
    %2303 = vmatprep.subr.mxu0 %v1210
    %2304 = vmatpush1.msra.mxu0 %v1209
    %2305 = vmatprep.subr.mxu0 %v1212
    %2306 = vmatpush1.msra.mxu0 %v1211
    %2307 = vmatprep.subr.mxu0 %v1214
    %2308 = vmatpush1.msra.mxu0 %v1213
    %2309 = vmatprep.subr.mxu0 %v1216
    %2310 = vmatpush1.msra.mxu0 %v1215
    %2311 = vmatprep.subr.mxu0 %v1218
    %2312 = vmatpush1.msra.mxu0 %v1217
    %2313 = vmatprep.subr.mxu0 %v1220
    %2314 = vmatpush1.msra.mxu0 %v1219
    %2315 = vmatprep.subr.mxu0 %v1222
    %2316 = vmatpush1.msra.mxu0 %v1221
    %2317 = vmatprep.subr.mxu0 %v1224
    %2318 = vmatpush1.msra.mxu0 %v1223
    %2319 = vmatprep.subr.mxu0 %v1226
    %2320 = vmatpush1.msra.mxu0 %v1225
    %2321 = vmatprep.subr.mxu0 %v1228
    %2322 = vmatpush1.msra.mxu0 %v1227
    %2323 = vmatprep.subr.mxu0 %v1230
    %2324 = vmatpush1.msra.mxu0 %v1229
    %2325 = vmatprep.subr.mxu0 %v1232
    %2326 = vmatpush1.msra.mxu0 %v1231
    %2327 = vmatprep.subr.mxu0 %v1234
    %2328 = vmatpush1.msra.mxu0 %v1233
    %2329 = vmatprep.mubr.f32.mxu0 %v520
    %2330 = vmatmul.mubr.f32.gmra.mrb[0].mxu0 %v519
    %v2331 = vpop.f32.mrb[0].mxu0
    %v2332 = vadd.f32 %v2261, %v2331
    %v2333 = vpop.f32.mrb[0].mxu0
    %v2334 = vadd.f32 %v2263, %v2333
    %2335 = vdwg.mxu0
    %2336 = vmatprep.subr.mxu0 %v1236
    %2337 = vmatpush1.msra.mxu0 %v1235
    %2338 = vmatprep.subr.mxu0 %v1238
    %2339 = vmatpush1.msra.mxu0 %v1237
    %2340 = vmatprep.subr.mxu0 %v1240
    %2341 = vmatpush1.msra.mxu0 %v1239
    %2342 = vmatprep.subr.mxu0 %v1242
    %2343 = vmatpush1.msra.mxu0 %v1241
    %2344 = vmatprep.subr.mxu0 %v1244
    %2345 = vmatpush1.msra.mxu0 %v1243
    %2346 = vmatprep.subr.mxu0 %v1246
    %2347 = vmatpush1.msra.mxu0 %v1245
    %2348 = vmatprep.subr.mxu0 %v1248
    %2349 = vmatpush1.msra.mxu0 %v1247
    %2350 = vmatprep.subr.mxu0 %v1250
    %2351 = vmatpush1.msra.mxu0 %v1249
    %2352 = vmatprep.subr.mxu0 %v1252
    %2353 = vmatpush1.msra.mxu0 %v1251
    %2354 = vmatprep.subr.mxu0 %v1254
    %2355 = vmatpush1.msra.mxu0 %v1253
    %2356 = vmatprep.subr.mxu0 %v1256
    %2357 = vmatpush1.msra.mxu0 %v1255
    %2358 = vmatprep.subr.mxu0 %v1258
    %2359 = vmatpush1.msra.mxu0 %v1257
    %2360 = vmatprep.subr.mxu0 %v1260
    %2361 = vmatpush1.msra.mxu0 %v1259
    %2362 = vmatprep.subr.mxu0 %v1262
    %2363 = vmatpush1.msra.mxu0 %v1261
    %2364 = vmatprep.subr.mxu0 %v1264
    %2365 = vmatpush1.msra.mxu0 %v1263
    %2366 = vmatprep.subr.mxu0 %v1266
    %2367 = vmatpush1.msra.mxu0 %v1265
    %2368 = vmatprep.subr.mxu0 %v1268
    %2369 = vmatpush1.msra.mxu0 %v1267
    %2370 = vmatprep.subr.mxu0 %v1270
    %2371 = vmatpush1.msra.mxu0 %v1269
    %2372 = vmatprep.subr.mxu0 %v1272
    %2373 = vmatpush1.msra.mxu0 %v1271
    %2374 = vmatprep.subr.mxu0 %v1274
    %2375 = vmatpush1.msra.mxu0 %v1273
    %2376 = vmatprep.subr.mxu0 %v1276
    %2377 = vmatpush1.msra.mxu0 %v1275
    %2378 = vmatprep.subr.mxu0 %v1278
    %2379 = vmatpush1.msra.mxu0 %v1277
    %2380 = vmatprep.subr.mxu0 %v1280
    %2381 = vmatpush1.msra.mxu0 %v1279
    %2382 = vmatprep.subr.mxu0 %v1282
    %2383 = vmatpush1.msra.mxu0 %v1281
    %2384 = vmatprep.subr.mxu0 %v1284
    %2385 = vmatpush1.msra.mxu0 %v1283
    %2386 = vmatprep.subr.mxu0 %v1286
    %2387 = vmatpush1.msra.mxu0 %v1285
    %2388 = vmatprep.subr.mxu0 %v1288
    %2389 = vmatpush1.msra.mxu0 %v1287
    %2390 = vmatprep.subr.mxu0 %v1290
    %2391 = vmatpush1.msra.mxu0 %v1289
    %2392 = vmatprep.subr.mxu0 %v1292
    %2393 = vmatpush1.msra.mxu0 %v1291
    %2394 = vmatprep.subr.mxu0 %v1294
    %2395 = vmatpush1.msra.mxu0 %v1293
    %2396 = vmatprep.subr.mxu0 %v1296
    %2397 = vmatpush1.msra.mxu0 %v1295
    %2398 = vmatprep.subr.mxu0 %v1298
    %2399 = vmatpush1.msra.mxu0 %v1297
    %2400 = vmatprep.mubr.f32.mxu0 %v522
    %2401 = vmatmul.mubr.f32.gmra.mrb[0].mxu0 %v521
    %v2402 = vpop.f32.mrb[0].mxu0
    %v2403 = vadd.f32 %v2332, %v2402
    %v2404 = vpop.f32.mrb[0].mxu0
    %v2405 = vadd.f32 %v2334, %v2404
    %2406 = vdwg.mxu0
    %2407 = vmatprep.subr.mxu0 %v1300
    %2408 = vmatpush1.msra.mxu0 %v1299
    %2409 = vmatprep.subr.mxu0 %v1302
    %2410 = vmatpush1.msra.mxu0 %v1301
    %2411 = vmatprep.subr.mxu0 %v1304
    %2412 = vmatpush1.msra.mxu0 %v1303
    %2413 = vmatprep.subr.mxu0 %v1306
    %2414 = vmatpush1.msra.mxu0 %v1305
    %2415 = vmatprep.subr.mxu0 %v1308
    %2416 = vmatpush1.msra.mxu0 %v1307
    %2417 = vmatprep.subr.mxu0 %v1310
    %2418 = vmatpush1.msra.mxu0 %v1309
    %2419 = vmatprep.subr.mxu0 %v1312
    %2420 = vmatpush1.msra.mxu0 %v1311
    %2421 = vmatprep.subr.mxu0 %v1314
    %2422 = vmatpush1.msra.mxu0 %v1313
    %2423 = vmatprep.subr.mxu0 %v1316
    %2424 = vmatpush1.msra.mxu0 %v1315
    %2425 = vmatprep.subr.mxu0 %v1318
    %2426 = vmatpush1.msra.mxu0 %v1317
    %2427 = vmatprep.subr.mxu0 %v1320
    %2428 = vmatpush1.msra.mxu0 %v1319
    %2429 = vmatprep.subr.mxu0 %v1322
    %2430 = vmatpush1.msra.mxu0 %v1321
    %2431 = vmatprep.subr.mxu0 %v1324
    %2432 = vmatpush1.msra.mxu0 %v1323
    %2433 = vmatprep.subr.mxu0 %v1326
    %2434 = vmatpush1.msra.mxu0 %v1325
    %2435 = vmatprep.subr.mxu0 %v1328
    %2436 = vmatpush1.msra.mxu0 %v1327
    %2437 = vmatprep.subr.mxu0 %v1330
    %2438 = vmatpush1.msra.mxu0 %v1329
    %2439 = vmatprep.subr.mxu0 %v1332
    %2440 = vmatpush1.msra.mxu0 %v1331
    %2441 = vmatprep.subr.mxu0 %v1334
    %2442 = vmatpush1.msra.mxu0 %v1333
    %2443 = vmatprep.subr.mxu0 %v1336
    %2444 = vmatpush1.msra.mxu0 %v1335
    %2445 = vmatprep.subr.mxu0 %v1338
    %2446 = vmatpush1.msra.mxu0 %v1337
    %2447 = vmatprep.subr.mxu0 %v1340
    %2448 = vmatpush1.msra.mxu0 %v1339
    %2449 = vmatprep.subr.mxu0 %v1342
    %2450 = vmatpush1.msra.mxu0 %v1341
    %2451 = vmatprep.subr.mxu0 %v1344
    %2452 = vmatpush1.msra.mxu0 %v1343
    %2453 = vmatprep.subr.mxu0 %v1346
    %2454 = vmatpush1.msra.mxu0 %v1345
    %2455 = vmatprep.subr.mxu0 %v1348
    %2456 = vmatpush1.msra.mxu0 %v1347
    %2457 = vmatprep.subr.mxu0 %v1350
    %2458 = vmatpush1.msra.mxu0 %v1349
    %2459 = vmatprep.subr.mxu0 %v1352
    %2460 = vmatpush1.msra.mxu0 %v1351
    %2461 = vmatprep.subr.mxu0 %v1354
    %2462 = vmatpush1.msra.mxu0 %v1353
    %2463 = vmatprep.subr.mxu0 %v1356
    %2464 = vmatpush1.msra.mxu0 %v1355
    %2465 = vmatprep.subr.mxu0 %v1358
    %2466 = vmatpush1.msra.mxu0 %v1357
    %2467 = vmatprep.subr.mxu0 %v1360
    %2468 = vmatpush1.msra.mxu0 %v1359
    %2469 = vmatprep.subr.mxu0 %v1362
    %2470 = vmatpush1.msra.mxu0 %v1361
    %2471 = vmatprep.mubr.f32.mxu0 %v524
    %2472 = vmatmul.mubr.f32.gmra.mrb[0].mxu0 %v523
    %v2473 = vpop.f32.mrb[0].mxu0
    %v2474 = vadd.f32 %v2403, %v2473
    %v2475 = vpop.f32.mrb[0].mxu0
    %v2476 = vadd.f32 %v2405, %v2475
    %2477 = vdwg.mxu0
    %2478 = vmatprep.subr.mxu0 %v1364
    %2479 = vmatpush1.msra.mxu0 %v1363
    %2480 = vmatprep.subr.mxu0 %v1366
    %2481 = vmatpush1.msra.mxu0 %v1365
    %2482 = vmatprep.subr.mxu0 %v1368
    %2483 = vmatpush1.msra.mxu0 %v1367
    %2484 = vmatprep.subr.mxu0 %v1370
    %2485 = vmatpush1.msra.mxu0 %v1369
    %2486 = vmatprep.subr.mxu0 %v1372
    %2487 = vmatpush1.msra.mxu0 %v1371
    %2488 = vmatprep.subr.mxu0 %v1374
    %2489 = vmatpush1.msra.mxu0 %v1373
    %2490 = vmatprep.subr.mxu0 %v1376
    %2491 = vmatpush1.msra.mxu0 %v1375
    %2492 = vmatprep.subr.mxu0 %v1378
    %2493 = vmatpush1.msra.mxu0 %v1377
    %2494 = vmatprep.subr.mxu0 %v1380
    %2495 = vmatpush1.msra.mxu0 %v1379
    %2496 = vmatprep.subr.mxu0 %v1382
    %2497 = vmatpush1.msra.mxu0 %v1381
    %2498 = vmatprep.subr.mxu0 %v1384
    %2499 = vmatpush1.msra.mxu0 %v1383
    %2500 = vmatprep.subr.mxu0 %v1386
    %2501 = vmatpush1.msra.mxu0 %v1385
    %2502 = vmatprep.subr.mxu0 %v1388
    %2503 = vmatpush1.msra.mxu0 %v1387
    %2504 = vmatprep.subr.mxu0 %v1390
    %2505 = vmatpush1.msra.mxu0 %v1389
    %2506 = vmatprep.subr.mxu0 %v1392
    %2507 = vmatpush1.msra.mxu0 %v1391
    %2508 = vmatprep.subr.mxu0 %v1394
    %2509 = vmatpush1.msra.mxu0 %v1393
    %2510 = vmatprep.subr.mxu0 %v1396
    %2511 = vmatpush1.msra.mxu0 %v1395
    %2512 = vmatprep.subr.mxu0 %v1398
    %2513 = vmatpush1.msra.mxu0 %v1397
    %2514 = vmatprep.subr.mxu0 %v1400
    %2515 = vmatpush1.msra.mxu0 %v1399
    %2516 = vmatprep.subr.mxu0 %v1402
    %2517 = vmatpush1.msra.mxu0 %v1401
    %2518 = vmatprep.subr.mxu0 %v1404
    %2519 = vmatpush1.msra.mxu0 %v1403
    %2520 = vmatprep.subr.mxu0 %v1406
    %2521 = vmatpush1.msra.mxu0 %v1405
    %2522 = vmatprep.subr.mxu0 %v1408
    %2523 = vmatpush1.msra.mxu0 %v1407
    %2524 = vmatprep.subr.mxu0 %v1410
    %2525 = vmatpush1.msra.mxu0 %v1409
    %2526 = vmatprep.subr.mxu0 %v1412
    %2527 = vmatpush1.msra.mxu0 %v1411
    %2528 = vmatprep.subr.mxu0 %v1414
    %2529 = vmatpush1.msra.mxu0 %v1413
    %2530 = vmatprep.subr.mxu0 %v1416
    %2531 = vmatpush1.msra.mxu0 %v1415
    %2532 = vmatprep.subr.mxu0 %v1418
    %2533 = vmatpush1.msra.mxu0 %v1417
    %2534 = vmatprep.subr.mxu0 %v1420
    %2535 = vmatpush1.msra.mxu0 %v1419
    %2536 = vmatprep.subr.mxu0 %v1422
    %2537 = vmatpush1.msra.mxu0 %v1421
    %2538 = vmatprep.subr.mxu0 %v1424
    %2539 = vmatpush1.msra.mxu0 %v1423
    %2540 = vmatprep.subr.mxu0 %v1426
    %2541 = vmatpush1.msra.mxu0 %v1425
    %2542 = vmatprep.mubr.f32.mxu0 %v526
    %2543 = vmatmul.mubr.f32.gmra.mrb[0].mxu0 %v525
    %v2544 = vpop.f32.mrb[0].mxu0
    %v2545 = vadd.f32 %v2474, %v2544
    %v2546 = vpop.f32.mrb[0].mxu0
    %v2547 = vadd.f32 %v2476, %v2546
    %2548 = vdwg.mxu0
    %2549 = vmatprep.subr.mxu0 %v1428
    %2550 = vmatpush1.msra.mxu0 %v1427
    %2551 = vmatprep.subr.mxu0 %v1430
    %2552 = vmatpush1.msra.mxu0 %v1429
    %2553 = vmatprep.subr.mxu0 %v1432
    %2554 = vmatpush1.msra.mxu0 %v1431
    %2555 = vmatprep.subr.mxu0 %v1434
    %2556 = vmatpush1.msra.mxu0 %v1433
    %2557 = vmatprep.subr.mxu0 %v1436
    %2558 = vmatpush1.msra.mxu0 %v1435
    %2559 = vmatprep.subr.mxu0 %v1438
    %2560 = vmatpush1.msra.mxu0 %v1437
    %2561 = vmatprep.subr.mxu0 %v1440
    %2562 = vmatpush1.msra.mxu0 %v1439
    %2563 = vmatprep.subr.mxu0 %v1442
    %2564 = vmatpush1.msra.mxu0 %v1441
    %2565 = vmatprep.subr.mxu0 %v1444
    %2566 = vmatpush1.msra.mxu0 %v1443
    %2567 = vmatprep.subr.mxu0 %v1446
    %2568 = vmatpush1.msra.mxu0 %v1445
    %2569 = vmatprep.subr.mxu0 %v1448
    %2570 = vmatpush1.msra.mxu0 %v1447
    %2571 = vmatprep.subr.mxu0 %v1450
    %2572 = vmatpush1.msra.mxu0 %v1449
    %2573 = vmatprep.subr.mxu0 %v1452
    %2574 = vmatpush1.msra.mxu0 %v1451
    %2575 = vmatprep.subr.mxu0 %v1454
    %2576 = vmatpush1.msra.mxu0 %v1453
    %2577 = vmatprep.subr.mxu0 %v1456
    %2578 = vmatpush1.msra.mxu0 %v1455
    %2579 = vmatprep.subr.mxu0 %v1458
    %2580 = vmatpush1.msra.mxu0 %v1457
    %2581 = vmatprep.subr.mxu0 %v1460
    %2582 = vmatpush1.msra.mxu0 %v1459
    %2583 = vmatprep.subr.mxu0 %v1462
    %2584 = vmatpush1.msra.mxu0 %v1461
    %2585 = vmatprep.subr.mxu0 %v1464
    %2586 = vmatpush1.msra.mxu0 %v1463
    %2587 = vmatprep.subr.mxu0 %v1466
    %2588 = vmatpush1.msra.mxu0 %v1465
    %2589 = vmatprep.subr.mxu0 %v1468
    %2590 = vmatpush1.msra.mxu0 %v1467
    %2591 = vmatprep.subr.mxu0 %v1470
    %2592 = vmatpush1.msra.mxu0 %v1469
    %2593 = vmatprep.subr.mxu0 %v1472
    %2594 = vmatpush1.msra.mxu0 %v1471
    %2595 = vmatprep.subr.mxu0 %v1474
    %2596 = vmatpush1.msra.mxu0 %v1473
    %2597 = vmatprep.subr.mxu0 %v1476
    %2598 = vmatpush1.msra.mxu0 %v1475
    %2599 = vmatprep.subr.mxu0 %v1478
    %2600 = vmatpush1.msra.mxu0 %v1477
    %2601 = vmatprep.subr.mxu0 %v1480
    %2602 = vmatpush1.msra.mxu0 %v1479
    %2603 = vmatprep.subr.mxu0 %v1482
    %2604 = vmatpush1.msra.mxu0 %v1481
    %2605 = vmatprep.subr.mxu0 %v1484
    %2606 = vmatpush1.msra.mxu0 %v1483
    %2607 = vmatprep.subr.mxu0 %v1486
    %2608 = vmatpush1.msra.mxu0 %v1485
    %2609 = vmatprep.subr.mxu0 %v1488
    %2610 = vmatpush1.msra.mxu0 %v1487
    %2611 = vmatprep.subr.mxu0 %v1490
    %2612 = vmatpush1.msra.mxu0 %v1489
    %2613 = vmatprep.mubr.f32.mxu0 %v528
    %2614 = vmatmul.mubr.f32.gmra.mrb[0].mxu0 %v527
    %v2615 = vpop.f32.mrb[0].mxu0
    %v2616 = vadd.f32 %v2545, %v2615
    %v2617 = vpop.f32.mrb[0].mxu0
    %v2618 = vadd.f32 %v2547, %v2617
    %2619 = vdwg.mxu0
    %2620 = vmatprep.subr.mxu0 %v1492
    %2621 = vmatpush1.msra.mxu0 %v1491
    %2622 = vmatprep.subr.mxu0 %v1494
    %2623 = vmatpush1.msra.mxu0 %v1493
    %2624 = vmatprep.subr.mxu0 %v1496
    %2625 = vmatpush1.msra.mxu0 %v1495
    %2626 = vmatprep.subr.mxu0 %v1498
    %2627 = vmatpush1.msra.mxu0 %v1497
    %2628 = vmatprep.subr.mxu0 %v1500
    %2629 = vmatpush1.msra.mxu0 %v1499
    %2630 = vmatprep.subr.mxu0 %v1502
    %2631 = vmatpush1.msra.mxu0 %v1501
    %2632 = vmatprep.subr.mxu0 %v1504
    %2633 = vmatpush1.msra.mxu0 %v1503
    %2634 = vmatprep.subr.mxu0 %v1506
    %2635 = vmatpush1.msra.mxu0 %v1505
    %2636 = vmatprep.subr.mxu0 %v1508
    %2637 = vmatpush1.msra.mxu0 %v1507
    %2638 = vmatprep.subr.mxu0 %v1510
    %2639 = vmatpush1.msra.mxu0 %v1509
    %2640 = vmatprep.subr.mxu0 %v1512
    %2641 = vmatpush1.msra.mxu0 %v1511
    %2642 = vmatprep.subr.mxu0 %v1514
    %2643 = vmatpush1.msra.mxu0 %v1513
    %2644 = vmatprep.subr.mxu0 %v1516
    %2645 = vmatpush1.msra.mxu0 %v1515
    %2646 = vmatprep.subr.mxu0 %v1518
    %2647 = vmatpush1.msra.mxu0 %v1517
    %2648 = vmatprep.subr.mxu0 %v1520
    %2649 = vmatpush1.msra.mxu0 %v1519
    %2650 = vmatprep.subr.mxu0 %v1522
    %2651 = vmatpush1.msra.mxu0 %v1521
    %2652 = vmatprep.subr.mxu0 %v1524
    %2653 = vmatpush1.msra.mxu0 %v1523
    %2654 = vmatprep.subr.mxu0 %v1526
    %2655 = vmatpush1.msra.mxu0 %v1525
    %2656 = vmatprep.subr.mxu0 %v1528
    %2657 = vmatpush1.msra.mxu0 %v1527
    %2658 = vmatprep.subr.mxu0 %v1530
    %2659 = vmatpush1.msra.mxu0 %v1529
    %2660 = vmatprep.subr.mxu0 %v1532
    %2661 = vmatpush1.msra.mxu0 %v1531
    %2662 = vmatprep.subr.mxu0 %v1534
    %2663 = vmatpush1.msra.mxu0 %v1533
    %2664 = vmatprep.subr.mxu0 %v1536
    %2665 = vmatpush1.msra.mxu0 %v1535
    %2666 = vmatprep.subr.mxu0 %v1538
    %2667 = vmatpush1.msra.mxu0 %v1537
    %2668 = vmatprep.subr.mxu0 %v1540
    %2669 = vmatpush1.msra.mxu0 %v1539
    %2670 = vmatprep.subr.mxu0 %v1542
    %2671 = vmatpush1.msra.mxu0 %v1541
    %2672 = vmatprep.subr.mxu0 %v1544
    %2673 = vmatpush1.msra.mxu0 %v1543
    %2674 = vmatprep.subr.mxu0 %v1546
    %2675 = vmatpush1.msra.mxu0 %v1545
    %2676 = vmatprep.subr.mxu0 %v1548
    %2677 = vmatpush1.msra.mxu0 %v1547
    %2678 = vmatprep.subr.mxu0 %v1550
    %2679 = vmatpush1.msra.mxu0 %v1549
    %2680 = vmatprep.subr.mxu0 %v1552
    %2681 = vmatpush1.msra.mxu0 %v1551
    %2682 = vmatprep.subr.mxu0 %v1554
    %2683 = vmatpush1.msra.mxu0 %v1553
    %2684 = vmatprep.mubr.f32.mxu0 %v530
    %2685 = vmatmul.mubr.f32.gmra.mrb[0].mxu0 %v529
    %v2686 = vpop.f32.mrb[0].mxu0
    %v2687 = vadd.f32 %v2616, %v2686
    %v2688 = vpop.f32.mrb[0].mxu0
    %v2689 = vadd.f32 %v2618, %v2688
    %2690 = vdwg.mxu0
    %2691 = vst [vmem:[#allocation10] sm:$0xff] %v2687
    %2692 = vst [vmem:[#allocation10 + $0x8] sm:$0xff] %v2689
    // Predicated region
    $region34: #{tpu_custom_call.1} parent=1 // pred_check
      _
    $region35: #{tpu_custom_call.1} parent=1 // pred_check_branch
      %2694 = sbr.rel (0) target = $region37
    $region36: #{tpu_custom_call.1} parent=1 // pred_region
      %s2696 = ssub.s32 256, 256
      %2697 = vsyncadd [#allocation4], %s2696
      %s2699 = sshll.u32 [#allocation10], 4
      %s2700 = int_to_ptr.vmem [resolvable:$true] %s2699
      %2702 = dma.vmem_to_hbm [thread:$0]  %s2700, 256, %s4, [#allocation4]
    $region37: #{tpu_custom_call.1} parent=1 // pred_fallthru
      _
    // Predicated region
    $region38: #{tpu_custom_call.1} parent=1 // pred_check
      _
    $region39: #{tpu_custom_call.1} parent=1 // pred_check_branch
      %2704 = sbr.rel (0) target = $region41
    $region40: #{tpu_custom_call.1} parent=1 // pred_region
      %2705 = dma.done [#allocation4], 256
    $region41: #{tpu_custom_call.1} parent=1 // pred_fallthru
      _
    %2706 = vsyncpa [#allocation3], 1
    %2707 = vsyncpa [#allocation6], 1
    %2708 = vsyncpa [#allocation9], 1
    %2709 = vsyncpa [#allocation4], 1

</llo_original>
